<compile_context>
chip_gen: v5e
topology: v5e:2x2
jax: 0.10.0
libtpu: 0.0.40
codegen_flags: <defaults>
</compile_context>

<pallas_src>
from functools import partial

import jax
import jax.numpy as jnp
from jax.experimental import pallas as pl
from jax.experimental.pallas import tpu as pltpu


def _tensorcores_per_chip() -> int:
    """Best-effort count of TensorCores a single pallas_call can shard over."""
    try:
        dev = jax.devices()[0]
        for attr in ("num_cores", "core_count"):
            n = getattr(dev, attr, None)
            if isinstance(n, int) and n > 0:
                return n
        kind = str(getattr(dev, "device_kind", "")).lower()
        # v4 and v7x expose 2 TensorCores per chip; v5e/v6e have 1.
        if "v4" in kind or "v7" in kind or "7x" in kind:
            return 2
    except Exception:
        pass
    return 1


def mhsa_kernel(x_ref, wqkv_ref, wo_ref, bo_ref, o_ref,
                *, head: int, hidden: int, inv_sqrt_d: float):
    """x_ref: (bb, N, F); wqkv_ref: (F, 3H); wo_ref: (H, F); bo_ref: (1, F)."""
    bb, N, F = x_ref.shape
    hd = hidden // head

    # Fused QKV projection over all rows in this block: one wide MXU matmul.
    x2d = x_ref[...].reshape(bb * N, F)                                   # leading-dim reshape only
    qkv = jnp.dot(x2d, wqkv_ref[...], preferred_element_type=jnp.float32)  # (bb*N, 3H)

    # Fold the 1/sqrt(hidden) scale into q once (matches PyTorch's sqrt_d = hidden**0.5).
    q = qkv[:, 0:hidden] * inv_sqrt_d
    k = qkv[:, hidden:2 * hidden]
    v = qkv[:, 2 * hidden:3 * hidden]

    wo = wo_ref[...]                       # (H, F), loaded once
    bias = bo_ref[...].astype(jnp.float32)  # (1, F), broadcasts on add

    for b in range(bb):                    # static unroll; bb is 1 or B (both tiny)
        lo = b * N
        qb = q[lo:lo + N]
        kb = k[lo:lo + N]
        vb = v[lo:lo + N]

        acc = jnp.zeros((N, F), jnp.float32)
        for h in range(head):              # static unroll over heads (small & fixed)
            c0 = h * hd
            qh = qb[:, c0:c0 + hd]         # (N, hd)
            kh = kb[:, c0:c0 + hd]
            vh = vb[:, c0:c0 + hd]

            # dots = (q / sqrt_d) @ k^T  -> numerically stable softmax.
            dots = jnp.dot(qh, kh.T, preferred_element_type=jnp.float32)  # (N, N)
            dots = dots - jnp.max(dots, axis=-1, keepdims=True)
            e = jnp.exp(dots)
            denom = jnp.sum(e, axis=-1, keepdims=True)
            score = e * pl.reciprocal(denom, approx=True)                 # EUP reciprocal

            ctx_h = jnp.dot(score, vh, preferred_element_type=jnp.float32)  # (N, hd)
            # Fold this head's context directly into the output projection:
            # equivalent to concat-over-heads followed by ctx @ Wo, with no lane concat.
            acc = acc + jnp.dot(ctx_h, wo[c0:c0 + hd, :],
                                preferred_element_type=jnp.float32)         # (N, F)

        # output projection bias; dropout(p=0.0) is the identity
        o_ref[b] = (acc + bias).astype(o_ref.dtype)


def mhsa(x, wq, wk, wv, wo, bo, *, head: int, batch_block: int | None = None):
    """x: (B, N, F); wq/wk/wv: (F, H); wo: (H, F); bo: (1, F)."""
    B, N, F = x.shape
    H = wq.shape[1]
    inv_sqrt_d = 1.0 / (float(H) ** 0.5)   # PyTorch scales by hidden_feats ** 0.5

    # Fuse the projection weights once in the wrapper: (F, 3H).
    wqkv = jnp.concatenate([wq, wk, wv], axis=1)

    if batch_block is None:
        # Single-TC chips (v5e/v6e): collapse the batch into one grid step
        # (each grid step costs ~0.35us of fixed overhead, which dominates here).
        # Multi-TC chips (v7x): keep grid=(B,) so the parallel axis shards over cores.
        batch_block = B if _tensorcores_per_chip() == 1 else 1
    assert B % batch_block == 0, "batch_block must divide B"
    grid = (B // batch_block,)

    kernel = partial(mhsa_kernel, head=head, hidden=H, inv_sqrt_d=inv_sqrt_d)
    return pl.pallas_call(
        kernel,
        out_shape=jax.ShapeDtypeStruct((B, N, F), x.dtype),
        grid=grid,
        in_specs=[
            pl.BlockSpec((batch_block, N, F), lambda g: (g, 0, 0)),  # x block
            pl.BlockSpec((F, 3 * H), lambda g: (0, 0)),              # fused Wqkv (full)
            pl.BlockSpec((H, F), lambda g: (0, 0)),                  # Wo (full)
            pl.BlockSpec((1, F), lambda g: (0, 0)),                  # bias (full)
        ],
        out_specs=pl.BlockSpec((batch_block, N, F), lambda g: (g, 0, 0)),
        compiler_params=pltpu.CompilerParams(dimension_semantics=("parallel",)),
    )(x, wqkv, wo, bo)


def mhsa_reference(x, wq, wk, wv, wo, bo, *, head: int):
    """Pure-JAX reference mirroring the PyTorch forward exactly."""
    B, N, F = x.shape
    H = wq.shape[1]
    hd = H // head
    sqrt_d = float(H) ** 0.5
    q = (x @ wq).reshape(B, N, head, hd).transpose(0, 2, 1, 3)  # (B, h, N, hd)
    k = (x @ wk).reshape(B, N, head, hd).transpose(0, 2, 1, 3)
    v = (x @ wv).reshape(B, N, head, hd).transpose(0, 2, 1, 3)
    dots = jnp.einsum('bhif,bhjf->bhij', q, k) / sqrt_d
    score = jax.nn.softmax(dots, axis=-1)
    attn = jnp.einsum('bhij,bhjf->bihf', score, v)              # (B, N, h, hd)
    o = attn.reshape(B, N, H) @ wo + bo
    return o


if __name__ == "__main__":
    # Small shapes consistent with the module's forward.
    B, N, FEATS, HIDDEN, HEAD = 2, 8, 32, 32, 8

    key = jax.random.PRNGKey(0)
    kx, kq, kk, kv, ko, kb = jax.random.split(key, 6)

    x = jax.random.normal(kx, (B, N, FEATS), dtype=jnp.float32)
    # nn.Linear(feats, hidden, bias=False).weight is (hidden, feats); stored transposed (feats, hidden)
    wq = jax.random.normal(kq, (FEATS, HIDDEN), dtype=jnp.float32) * 0.1
    wk = jax.random.normal(kk, (FEATS, HIDDEN), dtype=jnp.float32) * 0.1
    wv = jax.random.normal(kv, (FEATS, HIDDEN), dtype=jnp.float32) * 0.1
    # nn.Linear(hidden, feats).weight is (feats, hidden); stored transposed (hidden, feats)
    wo = jax.random.normal(ko, (HIDDEN, FEATS), dtype=jnp.float32) * 0.1
    bo = jax.random.normal(kb, (1, FEATS), dtype=jnp.float32) * 0.1

    out = mhsa(x, wq, wk, wv, wo, bo, head=HEAD)
    out = jax.block_until_ready(out)

    ref = mhsa_reference(x, wq, wk, wv, wo, bo, head=HEAD)
    assert out.shape == (B, N, FEATS)
    # Tolerance is slightly relaxed because the softmax denominator uses the
    # EUP approximate reciprocal (pl.reciprocal(..., approx=True)).
    assert jnp.allclose(out, ref, atol=2e-3, rtol=2e-3), "Pallas output mismatch vs reference"

    print("KERNEL_OK")
</pallas_src>

<mosaic_0001>
module attributes {stable_mosaic.version = 11 : i64} {
  func.func @mhsa_kernel(%arg0: i32, %arg1: memref<2x8x32xf32, #tpu.memory_space<vmem>>, %arg2: memref<32x96xf32, #tpu.memory_space<vmem>>, %arg3: memref<32x32xf32, #tpu.memory_space<vmem>>, %arg4: memref<1x32xf32, #tpu.memory_space<vmem>>, %arg5: memref<2x8x32xf32, #tpu.memory_space<vmem>>) attributes {dimension_semantics = [#tpu.dimension_semantics<parallel>], iteration_bounds = array<i64: 1>, scalar_prefetch = 0 : i64, scratch_operands = 0 : i64, tpu.core_type = #tpu.core_type<tc>, window_params = [{transform_indices = @transform_0, window_bounds = array<i64: 2, 8, 32>}, {pipeline_mode = #tpu.pipeline_mode<synchronous>, transform_indices = @transform_1, window_bounds = array<i64: 32, 96>}, {pipeline_mode = #tpu.pipeline_mode<synchronous>, transform_indices = @transform_2, window_bounds = array<i64: 32, 32>}, {pipeline_mode = #tpu.pipeline_mode<synchronous>, transform_indices = @transform_3, window_bounds = array<i64: 1, 32>}, {transform_indices = @transform_4, window_bounds = array<i64: 2, 8, 32>}]} {
    %c0 = arith.constant 0 : index
    %c0_0 = arith.constant 0 : index
    %c0_1 = arith.constant 0 : index
    %0 = vector.load %arg1[%c0, %c0_0, %c0_1] : memref<2x8x32xf32, #tpu.memory_space<vmem>>, vector<2x8x32xf32>
    %1 = vector.shape_cast %0 : vector<2x8x32xf32> to vector<16x32xf32>
    %c0_2 = arith.constant 0 : index
    %c0_3 = arith.constant 0 : index
    %2 = vector.load %arg2[%c0_2, %c0_3] : memref<32x96xf32, #tpu.memory_space<vmem>>, vector<32x96xf32>
    %cst = arith.constant dense<0.000000e+00> : vector<16x96xf32>
    %3 = tpu.matmul %1, %2, %cst {dimension_numbers = #tpu.dot_dimension_numbers<[1], [0], [0], [1], [0, 0, 1, 1], [], []>} : vector<16x32xf32>, vector<32x96xf32>, vector<16x96xf32> -> vector<16x96xf32>
    %4 = vector.extract_strided_slice %3 {offsets = [0, 0], sizes = [16, 32], strides = [1, 1]} : vector<16x96xf32> to vector<16x32xf32>
    %cst_4 = arith.constant 0.176776692 : f32
    %5 = vector.broadcast %cst_4 : f32 to vector<16x32xf32>
    %6 = arith.mulf %4, %5 : vector<16x32xf32>
    %7 = vector.extract_strided_slice %3 {offsets = [0, 32], sizes = [16, 32], strides = [1, 1]} : vector<16x96xf32> to vector<16x32xf32>
    %8 = vector.extract_strided_slice %3 {offsets = [0, 64], sizes = [16, 32], strides = [1, 1]} : vector<16x96xf32> to vector<16x32xf32>
    %c0_5 = arith.constant 0 : index
    %c0_6 = arith.constant 0 : index
    %9 = vector.load %arg3[%c0_5, %c0_6] : memref<32x32xf32, #tpu.memory_space<vmem>>, vector<32x32xf32>
    %c0_7 = arith.constant 0 : index
    %c0_8 = arith.constant 0 : index
    %10 = vector.load %arg4[%c0_7, %c0_8] : memref<1x32xf32, #tpu.memory_space<vmem>>, vector<1x32xf32>
    %11 = vector.extract_strided_slice %6 {offsets = [0, 0], sizes = [8, 32], strides = [1, 1]} : vector<16x32xf32> to vector<8x32xf32>
    %12 = vector.extract_strided_slice %7 {offsets = [0, 0], sizes = [8, 32], strides = [1, 1]} : vector<16x32xf32> to vector<8x32xf32>
    %13 = vector.extract_strided_slice %8 {offsets = [0, 0], sizes = [8, 32], strides = [1, 1]} : vector<16x32xf32> to vector<8x32xf32>
    %cst_9 = arith.constant 0.000000e+00 : f32
    %14 = vector.broadcast %cst_9 : f32 to vector<8x32xf32>
    %15 = vector.extract_strided_slice %11 {offsets = [0, 0], sizes = [8, 4], strides = [1, 1]} : vector<8x32xf32> to vector<8x4xf32>
    %16 = vector.extract_strided_slice %12 {offsets = [0, 0], sizes = [8, 4], strides = [1, 1]} : vector<8x32xf32> to vector<8x4xf32>
    %17 = vector.extract_strided_slice %13 {offsets = [0, 0], sizes = [8, 4], strides = [1, 1]} : vector<8x32xf32> to vector<8x4xf32>
    %18 = tpu.transpose %16, [1, 0] : vector<8x4xf32> -> vector<4x8xf32>
    %cst_10 = arith.constant dense<0.000000e+00> : vector<8x8xf32>
    %19 = tpu.matmul %15, %18, %cst_10 {dimension_numbers = #tpu.dot_dimension_numbers<[1], [0], [0], [1], [0, 0, 1, 1], [], []>} : vector<8x4xf32>, vector<4x8xf32>, vector<8x8xf32> -> vector<8x8xf32>
    %cst_11 = arith.constant dense<0xFF800000> : vector<8xf32>
    %20 = vector.multi_reduction <maximumf>, %19, %cst_11 [1] : vector<8x8xf32> to vector<8xf32>
    %21 = vector.shape_cast %20 : vector<8xf32> to vector<8x1xf32>
    %22 = vector.broadcast %21 : vector<8x1xf32> to vector<8x8xf32>
    %23 = arith.subf %19, %22 : vector<8x8xf32>
    %24 = math.exp %23 : vector<8x8xf32>
    %cst_12 = arith.constant dense<0.000000e+00> : vector<8xf32>
    %25 = vector.multi_reduction <add>, %24, %cst_12 [1] : vector<8x8xf32> to vector<8xf32>
    %26 = vector.shape_cast %25 : vector<8xf32> to vector<8x1xf32>
    %27 = tpu.reciprocal %26 {approx = true} : vector<8x1xf32> -> vector<8x1xf32>
    %28 = vector.broadcast %27 : vector<8x1xf32> to vector<8x8xf32>
    %29 = arith.mulf %24, %28 : vector<8x8xf32>
    %cst_13 = arith.constant dense<0.000000e+00> : vector<8x4xf32>
    %30 = tpu.matmul %29, %17, %cst_13 {dimension_numbers = #tpu.dot_dimension_numbers<[1], [0], [0], [1], [0, 0, 1, 1], [], []>} : vector<8x8xf32>, vector<8x4xf32>, vector<8x4xf32> -> vector<8x4xf32>
    %31 = vector.extract_strided_slice %9 {offsets = [0, 0], sizes = [4, 32], strides = [1, 1]} : vector<32x32xf32> to vector<4x32xf32>
    %cst_14 = arith.constant dense<0.000000e+00> : vector<8x32xf32>
    %32 = tpu.matmul %30, %31, %cst_14 {dimension_numbers = #tpu.dot_dimension_numbers<[1], [0], [0], [1], [0, 0, 1, 1], [], []>} : vector<8x4xf32>, vector<4x32xf32>, vector<8x32xf32> -> vector<8x32xf32>
    %33 = arith.addf %14, %32 : vector<8x32xf32>
    %34 = vector.extract_strided_slice %11 {offsets = [0, 4], sizes = [8, 4], strides = [1, 1]} : vector<8x32xf32> to vector<8x4xf32>
    %35 = vector.extract_strided_slice %12 {offsets = [0, 4], sizes = [8, 4], strides = [1, 1]} : vector<8x32xf32> to vector<8x4xf32>
    %36 = vector.extract_strided_slice %13 {offsets = [0, 4], sizes = [8, 4], strides = [1, 1]} : vector<8x32xf32> to vector<8x4xf32>
    %37 = tpu.transpose %35, [1, 0] : vector<8x4xf32> -> vector<4x8xf32>
    %cst_15 = arith.constant dense<0.000000e+00> : vector<8x8xf32>
    %38 = tpu.matmul %34, %37, %cst_15 {dimension_numbers = #tpu.dot_dimension_numbers<[1], [0], [0], [1], [0, 0, 1, 1], [], []>} : vector<8x4xf32>, vector<4x8xf32>, vector<8x8xf32> -> vector<8x8xf32>
    %cst_16 = arith.constant dense<0xFF800000> : vector<8xf32>
    %39 = vector.multi_reduction <maximumf>, %38, %cst_16 [1] : vector<8x8xf32> to vector<8xf32>
    %40 = vector.shape_cast %39 : vector<8xf32> to vector<8x1xf32>
    %41 = vector.broadcast %40 : vector<8x1xf32> to vector<8x8xf32>
    %42 = arith.subf %38, %41 : vector<8x8xf32>
    %43 = math.exp %42 : vector<8x8xf32>
    %cst_17 = arith.constant dense<0.000000e+00> : vector<8xf32>
    %44 = vector.multi_reduction <add>, %43, %cst_17 [1] : vector<8x8xf32> to vector<8xf32>
    %45 = vector.shape_cast %44 : vector<8xf32> to vector<8x1xf32>
    %46 = tpu.reciprocal %45 {approx = true} : vector<8x1xf32> -> vector<8x1xf32>
    %47 = vector.broadcast %46 : vector<8x1xf32> to vector<8x8xf32>
    %48 = arith.mulf %43, %47 : vector<8x8xf32>
    %cst_18 = arith.constant dense<0.000000e+00> : vector<8x4xf32>
    %49 = tpu.matmul %48, %36, %cst_18 {dimension_numbers = #tpu.dot_dimension_numbers<[1], [0], [0], [1], [0, 0, 1, 1], [], []>} : vector<8x8xf32>, vector<8x4xf32>, vector<8x4xf32> -> vector<8x4xf32>
    %50 = vector.extract_strided_slice %9 {offsets = [4, 0], sizes = [4, 32], strides = [1, 1]} : vector<32x32xf32> to vector<4x32xf32>
    %cst_19 = arith.constant dense<0.000000e+00> : vector<8x32xf32>
    %51 = tpu.matmul %49, %50, %cst_19 {dimension_numbers = #tpu.dot_dimension_numbers<[1], [0], [0], [1], [0, 0, 1, 1], [], []>} : vector<8x4xf32>, vector<4x32xf32>, vector<8x32xf32> -> vector<8x32xf32>
    %52 = arith.addf %33, %51 : vector<8x32xf32>
    %53 = vector.extract_strided_slice %11 {offsets = [0, 8], sizes = [8, 4], strides = [1, 1]} : vector<8x32xf32> to vector<8x4xf32>
    %54 = vector.extract_strided_slice %12 {offsets = [0, 8], sizes = [8, 4], strides = [1, 1]} : vector<8x32xf32> to vector<8x4xf32>
    %55 = vector.extract_strided_slice %13 {offsets = [0, 8], sizes = [8, 4], strides = [1, 1]} : vector<8x32xf32> to vector<8x4xf32>
    %56 = tpu.transpose %54, [1, 0] : vector<8x4xf32> -> vector<4x8xf32>
    %cst_20 = arith.constant dense<0.000000e+00> : vector<8x8xf32>
    %57 = tpu.matmul %53, %56, %cst_20 {dimension_numbers = #tpu.dot_dimension_numbers<[1], [0], [0], [1], [0, 0, 1, 1], [], []>} : vector<8x4xf32>, vector<4x8xf32>, vector<8x8xf32> -> vector<8x8xf32>
    %cst_21 = arith.constant dense<0xFF800000> : vector<8xf32>
    %58 = vector.multi_reduction <maximumf>, %57, %cst_21 [1] : vector<8x8xf32> to vector<8xf32>
    %59 = vector.shape_cast %58 : vector<8xf32> to vector<8x1xf32>
    %60 = vector.broadcast %59 : vector<8x1xf32> to vector<8x8xf32>
    %61 = arith.subf %57, %60 : vector<8x8xf32>
    %62 = math.exp %61 : vector<8x8xf32>
    %cst_22 = arith.constant dense<0.000000e+00> : vector<8xf32>
    %63 = vector.multi_reduction <add>, %62, %cst_22 [1] : vector<8x8xf32> to vector<8xf32>
    %64 = vector.shape_cast %63 : vector<8xf32> to vector<8x1xf32>
    %65 = tpu.reciprocal %64 {approx = true} : vector<8x1xf32> -> vector<8x1xf32>
    %66 = vector.broadcast %65 : vector<8x1xf32> to vector<8x8xf32>
    %67 = arith.mulf %62, %66 : vector<8x8xf32>
    %cst_23 = arith.constant dense<0.000000e+00> : vector<8x4xf32>
    %68 = tpu.matmul %67, %55, %cst_23 {dimension_numbers = #tpu.dot_dimension_numbers<[1], [0], [0], [1], [0, 0, 1, 1], [], []>} : vector<8x8xf32>, vector<8x4xf32>, vector<8x4xf32> -> vector<8x4xf32>
    %69 = vector.extract_strided_slice %9 {offsets = [8, 0], sizes = [4, 32], strides = [1, 1]} : vector<32x32xf32> to vector<4x32xf32>
    %cst_24 = arith.constant dense<0.000000e+00> : vector<8x32xf32>
    %70 = tpu.matmul %68, %69, %cst_24 {dimension_numbers = #tpu.dot_dimension_numbers<[1], [0], [0], [1], [0, 0, 1, 1], [], []>} : vector<8x4xf32>, vector<4x32xf32>, vector<8x32xf32> -> vector<8x32xf32>
    %71 = arith.addf %52, %70 : vector<8x32xf32>
    %72 = vector.extract_strided_slice %11 {offsets = [0, 12], sizes = [8, 4], strides = [1, 1]} : vector<8x32xf32> to vector<8x4xf32>
    %73 = vector.extract_strided_slice %12 {offsets = [0, 12], sizes = [8, 4], strides = [1, 1]} : vector<8x32xf32> to vector<8x4xf32>
    %74 = vector.extract_strided_slice %13 {offsets = [0, 12], sizes = [8, 4], strides = [1, 1]} : vector<8x32xf32> to vector<8x4xf32>
    %75 = tpu.transpose %73, [1, 0] : vector<8x4xf32> -> vector<4x8xf32>
    %cst_25 = arith.constant dense<0.000000e+00> : vector<8x8xf32>
    %76 = tpu.matmul %72, %75, %cst_25 {dimension_numbers = #tpu.dot_dimension_numbers<[1], [0], [0], [1], [0, 0, 1, 1], [], []>} : vector<8x4xf32>, vector<4x8xf32>, vector<8x8xf32> -> vector<8x8xf32>
    %cst_26 = arith.constant dense<0xFF800000> : vector<8xf32>
    %77 = vector.multi_reduction <maximumf>, %76, %cst_26 [1] : vector<8x8xf32> to vector<8xf32>
    %78 = vector.shape_cast %77 : vector<8xf32> to vector<8x1xf32>
    %79 = vector.broadcast %78 : vector<8x1xf32> to vector<8x8xf32>
    %80 = arith.subf %76, %79 : vector<8x8xf32>
    %81 = math.exp %80 : vector<8x8xf32>
    %cst_27 = arith.constant dense<0.000000e+00> : vector<8xf32>
    %82 = vector.multi_reduction <add>, %81, %cst_27 [1] : vector<8x8xf32> to vector<8xf32>
    %83 = vector.shape_cast %82 : vector<8xf32> to vector<8x1xf32>
    %84 = tpu.reciprocal %83 {approx = true} : vector<8x1xf32> -> vector<8x1xf32>
    %85 = vector.broadcast %84 : vector<8x1xf32> to vector<8x8xf32>
    %86 = arith.mulf %81, %85 : vector<8x8xf32>
    %cst_28 = arith.constant dense<0.000000e+00> : vector<8x4xf32>
    %87 = tpu.matmul %86, %74, %cst_28 {dimension_numbers = #tpu.dot_dimension_numbers<[1], [0], [0], [1], [0, 0, 1, 1], [], []>} : vector<8x8xf32>, vector<8x4xf32>, vector<8x4xf32> -> vector<8x4xf32>
    %88 = vector.extract_strided_slice %9 {offsets = [12, 0], sizes = [4, 32], strides = [1, 1]} : vector<32x32xf32> to vector<4x32xf32>
    %cst_29 = arith.constant dense<0.000000e+00> : vector<8x32xf32>
    %89 = tpu.matmul %87, %88, %cst_29 {dimension_numbers = #tpu.dot_dimension_numbers<[1], [0], [0], [1], [0, 0, 1, 1], [], []>} : vector<8x4xf32>, vector<4x32xf32>, vector<8x32xf32> -> vector<8x32xf32>
    %90 = arith.addf %71, %89 : vector<8x32xf32>
    %91 = vector.extract_strided_slice %11 {offsets = [0, 16], sizes = [8, 4], strides = [1, 1]} : vector<8x32xf32> to vector<8x4xf32>
    %92 = vector.extract_strided_slice %12 {offsets = [0, 16], sizes = [8, 4], strides = [1, 1]} : vector<8x32xf32> to vector<8x4xf32>
    %93 = vector.extract_strided_slice %13 {offsets = [0, 16], sizes = [8, 4], strides = [1, 1]} : vector<8x32xf32> to vector<8x4xf32>
    %94 = tpu.transpose %92, [1, 0] : vector<8x4xf32> -> vector<4x8xf32>
    %cst_30 = arith.constant dense<0.000000e+00> : vector<8x8xf32>
    %95 = tpu.matmul %91, %94, %cst_30 {dimension_numbers = #tpu.dot_dimension_numbers<[1], [0], [0], [1], [0, 0, 1, 1], [], []>} : vector<8x4xf32>, vector<4x8xf32>, vector<8x8xf32> -> vector<8x8xf32>
    %cst_31 = arith.constant dense<0xFF800000> : vector<8xf32>
    %96 = vector.multi_reduction <maximumf>, %95, %cst_31 [1] : vector<8x8xf32> to vector<8xf32>
    %97 = vector.shape_cast %96 : vector<8xf32> to vector<8x1xf32>
    %98 = vector.broadcast %97 : vector<8x1xf32> to vector<8x8xf32>
    %99 = arith.subf %95, %98 : vector<8x8xf32>
    %100 = math.exp %99 : vector<8x8xf32>
    %cst_32 = arith.constant dense<0.000000e+00> : vector<8xf32>
    %101 = vector.multi_reduction <add>, %100, %cst_32 [1] : vector<8x8xf32> to vector<8xf32>
    %102 = vector.shape_cast %101 : vector<8xf32> to vector<8x1xf32>
    %103 = tpu.reciprocal %102 {approx = true} : vector<8x1xf32> -> vector<8x1xf32>
    %104 = vector.broadcast %103 : vector<8x1xf32> to vector<8x8xf32>
    %105 = arith.mulf %100, %104 : vector<8x8xf32>
    %cst_33 = arith.constant dense<0.000000e+00> : vector<8x4xf32>
    %106 = tpu.matmul %105, %93, %cst_33 {dimension_numbers = #tpu.dot_dimension_numbers<[1], [0], [0], [1], [0, 0, 1, 1], [], []>} : vector<8x8xf32>, vector<8x4xf32>, vector<8x4xf32> -> vector<8x4xf32>
    %107 = vector.extract_strided_slice %9 {offsets = [16, 0], sizes = [4, 32], strides = [1, 1]} : vector<32x32xf32> to vector<4x32xf32>
    %cst_34 = arith.constant dense<0.000000e+00> : vector<8x32xf32>
    %108 = tpu.matmul %106, %107, %cst_34 {dimension_numbers = #tpu.dot_dimension_numbers<[1], [0], [0], [1], [0, 0, 1, 1], [], []>} : vector<8x4xf32>, vector<4x32xf32>, vector<8x32xf32> -> vector<8x32xf32>
    %109 = arith.addf %90, %108 : vector<8x32xf32>
    %110 = vector.extract_strided_slice %11 {offsets = [0, 20], sizes = [8, 4], strides = [1, 1]} : vector<8x32xf32> to vector<8x4xf32>
    %111 = vector.extract_strided_slice %12 {offsets = [0, 20], sizes = [8, 4], strides = [1, 1]} : vector<8x32xf32> to vector<8x4xf32>
    %112 = vector.extract_strided_slice %13 {offsets = [0, 20], sizes = [8, 4], strides = [1, 1]} : vector<8x32xf32> to vector<8x4xf32>
    %113 = tpu.transpose %111, [1, 0] : vector<8x4xf32> -> vector<4x8xf32>
    %cst_35 = arith.constant dense<0.000000e+00> : vector<8x8xf32>
    %114 = tpu.matmul %110, %113, %cst_35 {dimension_numbers = #tpu.dot_dimension_numbers<[1], [0], [0], [1], [0, 0, 1, 1], [], []>} : vector<8x4xf32>, vector<4x8xf32>, vector<8x8xf32> -> vector<8x8xf32>
    %cst_36 = arith.constant dense<0xFF800000> : vector<8xf32>
    %115 = vector.multi_reduction <maximumf>, %114, %cst_36 [1] : vector<8x8xf32> to vector<8xf32>
    %116 = vector.shape_cast %115 : vector<8xf32> to vector<8x1xf32>
    %117 = vector.broadcast %116 : vector<8x1xf32> to vector<8x8xf32>
    %118 = arith.subf %114, %117 : vector<8x8xf32>
    %119 = math.exp %118 : vector<8x8xf32>
    %cst_37 = arith.constant dense<0.000000e+00> : vector<8xf32>
    %120 = vector.multi_reduction <add>, %119, %cst_37 [1] : vector<8x8xf32> to vector<8xf32>
    %121 = vector.shape_cast %120 : vector<8xf32> to vector<8x1xf32>
    %122 = tpu.reciprocal %121 {approx = true} : vector<8x1xf32> -> vector<8x1xf32>
    %123 = vector.broadcast %122 : vector<8x1xf32> to vector<8x8xf32>
    %124 = arith.mulf %119, %123 : vector<8x8xf32>
    %cst_38 = arith.constant dense<0.000000e+00> : vector<8x4xf32>
    %125 = tpu.matmul %124, %112, %cst_38 {dimension_numbers = #tpu.dot_dimension_numbers<[1], [0], [0], [1], [0, 0, 1, 1], [], []>} : vector<8x8xf32>, vector<8x4xf32>, vector<8x4xf32> -> vector<8x4xf32>
    %126 = vector.extract_strided_slice %9 {offsets = [20, 0], sizes = [4, 32], strides = [1, 1]} : vector<32x32xf32> to vector<4x32xf32>
    %cst_39 = arith.constant dense<0.000000e+00> : vector<8x32xf32>
    %127 = tpu.matmul %125, %126, %cst_39 {dimension_numbers = #tpu.dot_dimension_numbers<[1], [0], [0], [1], [0, 0, 1, 1], [], []>} : vector<8x4xf32>, vector<4x32xf32>, vector<8x32xf32> -> vector<8x32xf32>
    %128 = arith.addf %109, %127 : vector<8x32xf32>
    %129 = vector.extract_strided_slice %11 {offsets = [0, 24], sizes = [8, 4], strides = [1, 1]} : vector<8x32xf32> to vector<8x4xf32>
    %130 = vector.extract_strided_slice %12 {offsets = [0, 24], sizes = [8, 4], strides = [1, 1]} : vector<8x32xf32> to vector<8x4xf32>
    %131 = vector.extract_strided_slice %13 {offsets = [0, 24], sizes = [8, 4], strides = [1, 1]} : vector<8x32xf32> to vector<8x4xf32>
    %132 = tpu.transpose %130, [1, 0] : vector<8x4xf32> -> vector<4x8xf32>
    %cst_40 = arith.constant dense<0.000000e+00> : vector<8x8xf32>
    %133 = tpu.matmul %129, %132, %cst_40 {dimension_numbers = #tpu.dot_dimension_numbers<[1], [0], [0], [1], [0, 0, 1, 1], [], []>} : vector<8x4xf32>, vector<4x8xf32>, vector<8x8xf32> -> vector<8x8xf32>
    %cst_41 = arith.constant dense<0xFF800000> : vector<8xf32>
    %134 = vector.multi_reduction <maximumf>, %133, %cst_41 [1] : vector<8x8xf32> to vector<8xf32>
    %135 = vector.shape_cast %134 : vector<8xf32> to vector<8x1xf32>
    %136 = vector.broadcast %135 : vector<8x1xf32> to vector<8x8xf32>
    %137 = arith.subf %133, %136 : vector<8x8xf32>
    %138 = math.exp %137 : vector<8x8xf32>
    %cst_42 = arith.constant dense<0.000000e+00> : vector<8xf32>
    %139 = vector.multi_reduction <add>, %138, %cst_42 [1] : vector<8x8xf32> to vector<8xf32>
    %140 = vector.shape_cast %139 : vector<8xf32> to vector<8x1xf32>
    %141 = tpu.reciprocal %140 {approx = true} : vector<8x1xf32> -> vector<8x1xf32>
    %142 = vector.broadcast %141 : vector<8x1xf32> to vector<8x8xf32>
    %143 = arith.mulf %138, %142 : vector<8x8xf32>
    %cst_43 = arith.constant dense<0.000000e+00> : vector<8x4xf32>
    %144 = tpu.matmul %143, %131, %cst_43 {dimension_numbers = #tpu.dot_dimension_numbers<[1], [0], [0], [1], [0, 0, 1, 1], [], []>} : vector<8x8xf32>, vector<8x4xf32>, vector<8x4xf32> -> vector<8x4xf32>
    %145 = vector.extract_strided_slice %9 {offsets = [24, 0], sizes = [4, 32], strides = [1, 1]} : vector<32x32xf32> to vector<4x32xf32>
    %cst_44 = arith.constant dense<0.000000e+00> : vector<8x32xf32>
    %146 = tpu.matmul %144, %145, %cst_44 {dimension_numbers = #tpu.dot_dimension_numbers<[1], [0], [0], [1], [0, 0, 1, 1], [], []>} : vector<8x4xf32>, vector<4x32xf32>, vector<8x32xf32> -> vector<8x32xf32>
    %147 = arith.addf %128, %146 : vector<8x32xf32>
    %148 = vector.extract_strided_slice %11 {offsets = [0, 28], sizes = [8, 4], strides = [1, 1]} : vector<8x32xf32> to vector<8x4xf32>
    %149 = vector.extract_strided_slice %12 {offsets = [0, 28], sizes = [8, 4], strides = [1, 1]} : vector<8x32xf32> to vector<8x4xf32>
    %150 = vector.extract_strided_slice %13 {offsets = [0, 28], sizes = [8, 4], strides = [1, 1]} : vector<8x32xf32> to vector<8x4xf32>
    %151 = tpu.transpose %149, [1, 0] : vector<8x4xf32> -> vector<4x8xf32>
    %cst_45 = arith.constant dense<0.000000e+00> : vector<8x8xf32>
    %152 = tpu.matmul %148, %151, %cst_45 {dimension_numbers = #tpu.dot_dimension_numbers<[1], [0], [0], [1], [0, 0, 1, 1], [], []>} : vector<8x4xf32>, vector<4x8xf32>, vector<8x8xf32> -> vector<8x8xf32>
    %cst_46 = arith.constant dense<0xFF800000> : vector<8xf32>
    %153 = vector.multi_reduction <maximumf>, %152, %cst_46 [1] : vector<8x8xf32> to vector<8xf32>
    %154 = vector.shape_cast %153 : vector<8xf32> to vector<8x1xf32>
    %155 = vector.broadcast %154 : vector<8x1xf32> to vector<8x8xf32>
    %156 = arith.subf %152, %155 : vector<8x8xf32>
    %157 = math.exp %156 : vector<8x8xf32>
    %cst_47 = arith.constant dense<0.000000e+00> : vector<8xf32>
    %158 = vector.multi_reduction <add>, %157, %cst_47 [1] : vector<8x8xf32> to vector<8xf32>
    %159 = vector.shape_cast %158 : vector<8xf32> to vector<8x1xf32>
    %160 = tpu.reciprocal %159 {approx = true} : vector<8x1xf32> -> vector<8x1xf32>
    %161 = vector.broadcast %160 : vector<8x1xf32> to vector<8x8xf32>
    %162 = arith.mulf %157, %161 : vector<8x8xf32>
    %cst_48 = arith.constant dense<0.000000e+00> : vector<8x4xf32>
    %163 = tpu.matmul %162, %150, %cst_48 {dimension_numbers = #tpu.dot_dimension_numbers<[1], [0], [0], [1], [0, 0, 1, 1], [], []>} : vector<8x8xf32>, vector<8x4xf32>, vector<8x4xf32> -> vector<8x4xf32>
    %164 = vector.extract_strided_slice %9 {offsets = [28, 0], sizes = [4, 32], strides = [1, 1]} : vector<32x32xf32> to vector<4x32xf32>
    %cst_49 = arith.constant dense<0.000000e+00> : vector<8x32xf32>
    %165 = tpu.matmul %163, %164, %cst_49 {dimension_numbers = #tpu.dot_dimension_numbers<[1], [0], [0], [1], [0, 0, 1, 1], [], []>} : vector<8x4xf32>, vector<4x32xf32>, vector<8x32xf32> -> vector<8x32xf32>
    %166 = arith.addf %147, %165 : vector<8x32xf32>
    %167 = vector.broadcast %10 : vector<1x32xf32> to vector<8x32xf32>
    %168 = arith.addf %166, %167 : vector<8x32xf32>
    %c0_50 = arith.constant 0 : index
    %c0_51 = arith.constant 0 : index
    %c0_52 = arith.constant 0 : index
    %169 = vector.load %arg5[%c0_50, %c0_51, %c0_52] : memref<2x8x32xf32, #tpu.memory_space<vmem>>, vector<1x8x32xf32>
    %170 = vector.shape_cast %169 : vector<1x8x32xf32> to vector<8x32xf32>
    %171 = vector.shape_cast %168 : vector<8x32xf32> to vector<1x8x32xf32>
    tpu.vector_store %arg5[%c0_50, %c0_51, %c0_52], %171 {strides = array<i32>} : memref<2x8x32xf32, #tpu.memory_space<vmem>>, vector<1x8x32xf32>,
    %172 = vector.extract_strided_slice %6 {offsets = [8, 0], sizes = [8, 32], strides = [1, 1]} : vector<16x32xf32> to vector<8x32xf32>
    %173 = vector.extract_strided_slice %7 {offsets = [8, 0], sizes = [8, 32], strides = [1, 1]} : vector<16x32xf32> to vector<8x32xf32>
    %174 = vector.extract_strided_slice %8 {offsets = [8, 0], sizes = [8, 32], strides = [1, 1]} : vector<16x32xf32> to vector<8x32xf32>
    %cst_53 = arith.constant 0.000000e+00 : f32
    %175 = vector.broadcast %cst_53 : f32 to vector<8x32xf32>
    %176 = vector.extract_strided_slice %172 {offsets = [0, 0], sizes = [8, 4], strides = [1, 1]} : vector<8x32xf32> to vector<8x4xf32>
    %177 = vector.extract_strided_slice %173 {offsets = [0, 0], sizes = [8, 4], strides = [1, 1]} : vector<8x32xf32> to vector<8x4xf32>
    %178 = vector.extract_strided_slice %174 {offsets = [0, 0], sizes = [8, 4], strides = [1, 1]} : vector<8x32xf32> to vector<8x4xf32>
    %179 = tpu.transpose %177, [1, 0] : vector<8x4xf32> -> vector<4x8xf32>
    %cst_54 = arith.constant dense<0.000000e+00> : vector<8x8xf32>
    %180 = tpu.matmul %176, %179, %cst_54 {dimension_numbers = #tpu.dot_dimension_numbers<[1], [0], [0], [1], [0, 0, 1, 1], [], []>} : vector<8x4xf32>, vector<4x8xf32>, vector<8x8xf32> -> vector<8x8xf32>
    %cst_55 = arith.constant dense<0xFF800000> : vector<8xf32>
    %181 = vector.multi_reduction <maximumf>, %180, %cst_55 [1] : vector<8x8xf32> to vector<8xf32>
    %182 = vector.shape_cast %181 : vector<8xf32> to vector<8x1xf32>
    %183 = vector.broadcast %182 : vector<8x1xf32> to vector<8x8xf32>
    %184 = arith.subf %180, %183 : vector<8x8xf32>
    %185 = math.exp %184 : vector<8x8xf32>
    %cst_56 = arith.constant dense<0.000000e+00> : vector<8xf32>
    %186 = vector.multi_reduction <add>, %185, %cst_56 [1] : vector<8x8xf32> to vector<8xf32>
    %187 = vector.shape_cast %186 : vector<8xf32> to vector<8x1xf32>
    %188 = tpu.reciprocal %187 {approx = true} : vector<8x1xf32> -> vector<8x1xf32>
    %189 = vector.broadcast %188 : vector<8x1xf32> to vector<8x8xf32>
    %190 = arith.mulf %185, %189 : vector<8x8xf32>
    %cst_57 = arith.constant dense<0.000000e+00> : vector<8x4xf32>
    %191 = tpu.matmul %190, %178, %cst_57 {dimension_numbers = #tpu.dot_dimension_numbers<[1], [0], [0], [1], [0, 0, 1, 1], [], []>} : vector<8x8xf32>, vector<8x4xf32>, vector<8x4xf32> -> vector<8x4xf32>
    %192 = vector.extract_strided_slice %9 {offsets = [0, 0], sizes = [4, 32], strides = [1, 1]} : vector<32x32xf32> to vector<4x32xf32>
    %cst_58 = arith.constant dense<0.000000e+00> : vector<8x32xf32>
    %193 = tpu.matmul %191, %192, %cst_58 {dimension_numbers = #tpu.dot_dimension_numbers<[1], [0], [0], [1], [0, 0, 1, 1], [], []>} : vector<8x4xf32>, vector<4x32xf32>, vector<8x32xf32> -> vector<8x32xf32>
    %194 = arith.addf %175, %193 : vector<8x32xf32>
    %195 = vector.extract_strided_slice %172 {offsets = [0, 4], sizes = [8, 4], strides = [1, 1]} : vector<8x32xf32> to vector<8x4xf32>
    %196 = vector.extract_strided_slice %173 {offsets = [0, 4], sizes = [8, 4], strides = [1, 1]} : vector<8x32xf32> to vector<8x4xf32>
    %197 = vector.extract_strided_slice %174 {offsets = [0, 4], sizes = [8, 4], strides = [1, 1]} : vector<8x32xf32> to vector<8x4xf32>
    %198 = tpu.transpose %196, [1, 0] : vector<8x4xf32> -> vector<4x8xf32>
    %cst_59 = arith.constant dense<0.000000e+00> : vector<8x8xf32>
    %199 = tpu.matmul %195, %198, %cst_59 {dimension_numbers = #tpu.dot_dimension_numbers<[1], [0], [0], [1], [0, 0, 1, 1], [], []>} : vector<8x4xf32>, vector<4x8xf32>, vector<8x8xf32> -> vector<8x8xf32>
    %cst_60 = arith.constant dense<0xFF800000> : vector<8xf32>
    %200 = vector.multi_reduction <maximumf>, %199, %cst_60 [1] : vector<8x8xf32> to vector<8xf32>
    %201 = vector.shape_cast %200 : vector<8xf32> to vector<8x1xf32>
    %202 = vector.broadcast %201 : vector<8x1xf32> to vector<8x8xf32>
    %203 = arith.subf %199, %202 : vector<8x8xf32>
    %204 = math.exp %203 : vector<8x8xf32>
    %cst_61 = arith.constant dense<0.000000e+00> : vector<8xf32>
    %205 = vector.multi_reduction <add>, %204, %cst_61 [1] : vector<8x8xf32> to vector<8xf32>
    %206 = vector.shape_cast %205 : vector<8xf32> to vector<8x1xf32>
    %207 = tpu.reciprocal %206 {approx = true} : vector<8x1xf32> -> vector<8x1xf32>
    %208 = vector.broadcast %207 : vector<8x1xf32> to vector<8x8xf32>
    %209 = arith.mulf %204, %208 : vector<8x8xf32>
    %cst_62 = arith.constant dense<0.000000e+00> : vector<8x4xf32>
    %210 = tpu.matmul %209, %197, %cst_62 {dimension_numbers = #tpu.dot_dimension_numbers<[1], [0], [0], [1], [0, 0, 1, 1], [], []>} : vector<8x8xf32>, vector<8x4xf32>, vector<8x4xf32> -> vector<8x4xf32>
    %211 = vector.extract_strided_slice %9 {offsets = [4, 0], sizes = [4, 32], strides = [1, 1]} : vector<32x32xf32> to vector<4x32xf32>
    %cst_63 = arith.constant dense<0.000000e+00> : vector<8x32xf32>
    %212 = tpu.matmul %210, %211, %cst_63 {dimension_numbers = #tpu.dot_dimension_numbers<[1], [0], [0], [1], [0, 0, 1, 1], [], []>} : vector<8x4xf32>, vector<4x32xf32>, vector<8x32xf32> -> vector<8x32xf32>
    %213 = arith.addf %194, %212 : vector<8x32xf32>
    %214 = vector.extract_strided_slice %172 {offsets = [0, 8], sizes = [8, 4], strides = [1, 1]} : vector<8x32xf32> to vector<8x4xf32>
    %215 = vector.extract_strided_slice %173 {offsets = [0, 8], sizes = [8, 4], strides = [1, 1]} : vector<8x32xf32> to vector<8x4xf32>
    %216 = vector.extract_strided_slice %174 {offsets = [0, 8], sizes = [8, 4], strides = [1, 1]} : vector<8x32xf32> to vector<8x4xf32>
    %217 = tpu.transpose %215, [1, 0] : vector<8x4xf32> -> vector<4x8xf32>
    %cst_64 = arith.constant dense<0.000000e+00> : vector<8x8xf32>
    %218 = tpu.matmul %214, %217, %cst_64 {dimension_numbers = #tpu.dot_dimension_numbers<[1], [0], [0], [1], [0, 0, 1, 1], [], []>} : vector<8x4xf32>, vector<4x8xf32>, vector<8x8xf32> -> vector<8x8xf32>
    %cst_65 = arith.constant dense<0xFF800000> : vector<8xf32>
    %219 = vector.multi_reduction <maximumf>, %218, %cst_65 [1] : vector<8x8xf32> to vector<8xf32>
    %220 = vector.shape_cast %219 : vector<8xf32> to vector<8x1xf32>
    %221 = vector.broadcast %220 : vector<8x1xf32> to vector<8x8xf32>
    %222 = arith.subf %218, %221 : vector<8x8xf32>
    %223 = math.exp %222 : vector<8x8xf32>
    %cst_66 = arith.constant dense<0.000000e+00> : vector<8xf32>
    %224 = vector.multi_reduction <add>, %223, %cst_66 [1] : vector<8x8xf32> to vector<8xf32>
    %225 = vector.shape_cast %224 : vector<8xf32> to vector<8x1xf32>
    %226 = tpu.reciprocal %225 {approx = true} : vector<8x1xf32> -> vector<8x1xf32>
    %227 = vector.broadcast %226 : vector<8x1xf32> to vector<8x8xf32>
    %228 = arith.mulf %223, %227 : vector<8x8xf32>
    %cst_67 = arith.constant dense<0.000000e+00> : vector<8x4xf32>
    %229 = tpu.matmul %228, %216, %cst_67 {dimension_numbers = #tpu.dot_dimension_numbers<[1], [0], [0], [1], [0, 0, 1, 1], [], []>} : vector<8x8xf32>, vector<8x4xf32>, vector<8x4xf32> -> vector<8x4xf32>
    %230 = vector.extract_strided_slice %9 {offsets = [8, 0], sizes = [4, 32], strides = [1, 1]} : vector<32x32xf32> to vector<4x32xf32>
    %cst_68 = arith.constant dense<0.000000e+00> : vector<8x32xf32>
    %231 = tpu.matmul %229, %230, %cst_68 {dimension_numbers = #tpu.dot_dimension_numbers<[1], [0], [0], [1], [0, 0, 1, 1], [], []>} : vector<8x4xf32>, vector<4x32xf32>, vector<8x32xf32> -> vector<8x32xf32>
    %232 = arith.addf %213, %231 : vector<8x32xf32>
    %233 = vector.extract_strided_slice %172 {offsets = [0, 12], sizes = [8, 4], strides = [1, 1]} : vector<8x32xf32> to vector<8x4xf32>
    %234 = vector.extract_strided_slice %173 {offsets = [0, 12], sizes = [8, 4], strides = [1, 1]} : vector<8x32xf32> to vector<8x4xf32>
    %235 = vector.extract_strided_slice %174 {offsets = [0, 12], sizes = [8, 4], strides = [1, 1]} : vector<8x32xf32> to vector<8x4xf32>
    %236 = tpu.transpose %234, [1, 0] : vector<8x4xf32> -> vector<4x8xf32>
    %cst_69 = arith.constant dense<0.000000e+00> : vector<8x8xf32>
    %237 = tpu.matmul %233, %236, %cst_69 {dimension_numbers = #tpu.dot_dimension_numbers<[1], [0], [0], [1], [0, 0, 1, 1], [], []>} : vector<8x4xf32>, vector<4x8xf32>, vector<8x8xf32> -> vector<8x8xf32>
    %cst_70 = arith.constant dense<0xFF800000> : vector<8xf32>
    %238 = vector.multi_reduction <maximumf>, %237, %cst_70 [1] : vector<8x8xf32> to vector<8xf32>
    %239 = vector.shape_cast %238 : vector<8xf32> to vector<8x1xf32>
    %240 = vector.broadcast %239 : vector<8x1xf32> to vector<8x8xf32>
    %241 = arith.subf %237, %240 : vector<8x8xf32>
    %242 = math.exp %241 : vector<8x8xf32>
    %cst_71 = arith.constant dense<0.000000e+00> : vector<8xf32>
    %243 = vector.multi_reduction <add>, %242, %cst_71 [1] : vector<8x8xf32> to vector<8xf32>
    %244 = vector.shape_cast %243 : vector<8xf32> to vector<8x1xf32>
    %245 = tpu.reciprocal %244 {approx = true} : vector<8x1xf32> -> vector<8x1xf32>
    %246 = vector.broadcast %245 : vector<8x1xf32> to vector<8x8xf32>
    %247 = arith.mulf %242, %246 : vector<8x8xf32>
    %cst_72 = arith.constant dense<0.000000e+00> : vector<8x4xf32>
    %248 = tpu.matmul %247, %235, %cst_72 {dimension_numbers = #tpu.dot_dimension_numbers<[1], [0], [0], [1], [0, 0, 1, 1], [], []>} : vector<8x8xf32>, vector<8x4xf32>, vector<8x4xf32> -> vector<8x4xf32>
    %249 = vector.extract_strided_slice %9 {offsets = [12, 0], sizes = [4, 32], strides = [1, 1]} : vector<32x32xf32> to vector<4x32xf32>
    %cst_73 = arith.constant dense<0.000000e+00> : vector<8x32xf32>
    %250 = tpu.matmul %248, %249, %cst_73 {dimension_numbers = #tpu.dot_dimension_numbers<[1], [0], [0], [1], [0, 0, 1, 1], [], []>} : vector<8x4xf32>, vector<4x32xf32>, vector<8x32xf32> -> vector<8x32xf32>
    %251 = arith.addf %232, %250 : vector<8x32xf32>
    %252 = vector.extract_strided_slice %172 {offsets = [0, 16], sizes = [8, 4], strides = [1, 1]} : vector<8x32xf32> to vector<8x4xf32>
    %253 = vector.extract_strided_slice %173 {offsets = [0, 16], sizes = [8, 4], strides = [1, 1]} : vector<8x32xf32> to vector<8x4xf32>
    %254 = vector.extract_strided_slice %174 {offsets = [0, 16], sizes = [8, 4], strides = [1, 1]} : vector<8x32xf32> to vector<8x4xf32>
    %255 = tpu.transpose %253, [1, 0] : vector<8x4xf32> -> vector<4x8xf32>
    %cst_74 = arith.constant dense<0.000000e+00> : vector<8x8xf32>
    %256 = tpu.matmul %252, %255, %cst_74 {dimension_numbers = #tpu.dot_dimension_numbers<[1], [0], [0], [1], [0, 0, 1, 1], [], []>} : vector<8x4xf32>, vector<4x8xf32>, vector<8x8xf32> -> vector<8x8xf32>
    %cst_75 = arith.constant dense<0xFF800000> : vector<8xf32>
    %257 = vector.multi_reduction <maximumf>, %256, %cst_75 [1] : vector<8x8xf32> to vector<8xf32>
    %258 = vector.shape_cast %257 : vector<8xf32> to vector<8x1xf32>
    %259 = vector.broadcast %258 : vector<8x1xf32> to vector<8x8xf32>
    %260 = arith.subf %256, %259 : vector<8x8xf32>
    %261 = math.exp %260 : vector<8x8xf32>
    %cst_76 = arith.constant dense<0.000000e+00> : vector<8xf32>
    %262 = vector.multi_reduction <add>, %261, %cst_76 [1] : vector<8x8xf32> to vector<8xf32>
    %263 = vector.shape_cast %262 : vector<8xf32> to vector<8x1xf32>
    %264 = tpu.reciprocal %263 {approx = true} : vector<8x1xf32> -> vector<8x1xf32>
    %265 = vector.broadcast %264 : vector<8x1xf32> to vector<8x8xf32>
    %266 = arith.mulf %261, %265 : vector<8x8xf32>
    %cst_77 = arith.constant dense<0.000000e+00> : vector<8x4xf32>
    %267 = tpu.matmul %266, %254, %cst_77 {dimension_numbers = #tpu.dot_dimension_numbers<[1], [0], [0], [1], [0, 0, 1, 1], [], []>} : vector<8x8xf32>, vector<8x4xf32>, vector<8x4xf32> -> vector<8x4xf32>
    %268 = vector.extract_strided_slice %9 {offsets = [16, 0], sizes = [4, 32], strides = [1, 1]} : vector<32x32xf32> to vector<4x32xf32>
    %cst_78 = arith.constant dense<0.000000e+00> : vector<8x32xf32>
    %269 = tpu.matmul %267, %268, %cst_78 {dimension_numbers = #tpu.dot_dimension_numbers<[1], [0], [0], [1], [0, 0, 1, 1], [], []>} : vector<8x4xf32>, vector<4x32xf32>, vector<8x32xf32> -> vector<8x32xf32>
    %270 = arith.addf %251, %269 : vector<8x32xf32>
    %271 = vector.extract_strided_slice %172 {offsets = [0, 20], sizes = [8, 4], strides = [1, 1]} : vector<8x32xf32> to vector<8x4xf32>
    %272 = vector.extract_strided_slice %173 {offsets = [0, 20], sizes = [8, 4], strides = [1, 1]} : vector<8x32xf32> to vector<8x4xf32>
    %273 = vector.extract_strided_slice %174 {offsets = [0, 20], sizes = [8, 4], strides = [1, 1]} : vector<8x32xf32> to vector<8x4xf32>
    %274 = tpu.transpose %272, [1, 0] : vector<8x4xf32> -> vector<4x8xf32>
    %cst_79 = arith.constant dense<0.000000e+00> : vector<8x8xf32>
    %275 = tpu.matmul %271, %274, %cst_79 {dimension_numbers = #tpu.dot_dimension_numbers<[1], [0], [0], [1], [0, 0, 1, 1], [], []>} : vector<8x4xf32>, vector<4x8xf32>, vector<8x8xf32> -> vector<8x8xf32>
    %cst_80 = arith.constant dense<0xFF800000> : vector<8xf32>
    %276 = vector.multi_reduction <maximumf>, %275, %cst_80 [1] : vector<8x8xf32> to vector<8xf32>
    %277 = vector.shape_cast %276 : vector<8xf32> to vector<8x1xf32>
    %278 = vector.broadcast %277 : vector<8x1xf32> to vector<8x8xf32>
    %279 = arith.subf %275, %278 : vector<8x8xf32>
    %280 = math.exp %279 : vector<8x8xf32>
    %cst_81 = arith.constant dense<0.000000e+00> : vector<8xf32>
    %281 = vector.multi_reduction <add>, %280, %cst_81 [1] : vector<8x8xf32> to vector<8xf32>
    %282 = vector.shape_cast %281 : vector<8xf32> to vector<8x1xf32>
    %283 = tpu.reciprocal %282 {approx = true} : vector<8x1xf32> -> vector<8x1xf32>
    %284 = vector.broadcast %283 : vector<8x1xf32> to vector<8x8xf32>
    %285 = arith.mulf %280, %284 : vector<8x8xf32>
    %cst_82 = arith.constant dense<0.000000e+00> : vector<8x4xf32>
    %286 = tpu.matmul %285, %273, %cst_82 {dimension_numbers = #tpu.dot_dimension_numbers<[1], [0], [0], [1], [0, 0, 1, 1], [], []>} : vector<8x8xf32>, vector<8x4xf32>, vector<8x4xf32> -> vector<8x4xf32>
    %287 = vector.extract_strided_slice %9 {offsets = [20, 0], sizes = [4, 32], strides = [1, 1]} : vector<32x32xf32> to vector<4x32xf32>
    %cst_83 = arith.constant dense<0.000000e+00> : vector<8x32xf32>
    %288 = tpu.matmul %286, %287, %cst_83 {dimension_numbers = #tpu.dot_dimension_numbers<[1], [0], [0], [1], [0, 0, 1, 1], [], []>} : vector<8x4xf32>, vector<4x32xf32>, vector<8x32xf32> -> vector<8x32xf32>
    %289 = arith.addf %270, %288 : vector<8x32xf32>
    %290 = vector.extract_strided_slice %172 {offsets = [0, 24], sizes = [8, 4], strides = [1, 1]} : vector<8x32xf32> to vector<8x4xf32>
    %291 = vector.extract_strided_slice %173 {offsets = [0, 24], sizes = [8, 4], strides = [1, 1]} : vector<8x32xf32> to vector<8x4xf32>
    %292 = vector.extract_strided_slice %174 {offsets = [0, 24], sizes = [8, 4], strides = [1, 1]} : vector<8x32xf32> to vector<8x4xf32>
    %293 = tpu.transpose %291, [1, 0] : vector<8x4xf32> -> vector<4x8xf32>
    %cst_84 = arith.constant dense<0.000000e+00> : vector<8x8xf32>
    %294 = tpu.matmul %290, %293, %cst_84 {dimension_numbers = #tpu.dot_dimension_numbers<[1], [0], [0], [1], [0, 0, 1, 1], [], []>} : vector<8x4xf32>, vector<4x8xf32>, vector<8x8xf32> -> vector<8x8xf32>
    %cst_85 = arith.constant dense<0xFF800000> : vector<8xf32>
    %295 = vector.multi_reduction <maximumf>, %294, %cst_85 [1] : vector<8x8xf32> to vector<8xf32>
    %296 = vector.shape_cast %295 : vector<8xf32> to vector<8x1xf32>
    %297 = vector.broadcast %296 : vector<8x1xf32> to vector<8x8xf32>
    %298 = arith.subf %294, %297 : vector<8x8xf32>
    %299 = math.exp %298 : vector<8x8xf32>
    %cst_86 = arith.constant dense<0.000000e+00> : vector<8xf32>
    %300 = vector.multi_reduction <add>, %299, %cst_86 [1] : vector<8x8xf32> to vector<8xf32>
    %301 = vector.shape_cast %300 : vector<8xf32> to vector<8x1xf32>
    %302 = tpu.reciprocal %301 {approx = true} : vector<8x1xf32> -> vector<8x1xf32>
    %303 = vector.broadcast %302 : vector<8x1xf32> to vector<8x8xf32>
    %304 = arith.mulf %299, %303 : vector<8x8xf32>
    %cst_87 = arith.constant dense<0.000000e+00> : vector<8x4xf32>
    %305 = tpu.matmul %304, %292, %cst_87 {dimension_numbers = #tpu.dot_dimension_numbers<[1], [0], [0], [1], [0, 0, 1, 1], [], []>} : vector<8x8xf32>, vector<8x4xf32>, vector<8x4xf32> -> vector<8x4xf32>
    %306 = vector.extract_strided_slice %9 {offsets = [24, 0], sizes = [4, 32], strides = [1, 1]} : vector<32x32xf32> to vector<4x32xf32>
    %cst_88 = arith.constant dense<0.000000e+00> : vector<8x32xf32>
    %307 = tpu.matmul %305, %306, %cst_88 {dimension_numbers = #tpu.dot_dimension_numbers<[1], [0], [0], [1], [0, 0, 1, 1], [], []>} : vector<8x4xf32>, vector<4x32xf32>, vector<8x32xf32> -> vector<8x32xf32>
    %308 = arith.addf %289, %307 : vector<8x32xf32>
    %309 = vector.extract_strided_slice %172 {offsets = [0, 28], sizes = [8, 4], strides = [1, 1]} : vector<8x32xf32> to vector<8x4xf32>
    %310 = vector.extract_strided_slice %173 {offsets = [0, 28], sizes = [8, 4], strides = [1, 1]} : vector<8x32xf32> to vector<8x4xf32>
    %311 = vector.extract_strided_slice %174 {offsets = [0, 28], sizes = [8, 4], strides = [1, 1]} : vector<8x32xf32> to vector<8x4xf32>
    %312 = tpu.transpose %310, [1, 0] : vector<8x4xf32> -> vector<4x8xf32>
    %cst_89 = arith.constant dense<0.000000e+00> : vector<8x8xf32>
    %313 = tpu.matmul %309, %312, %cst_89 {dimension_numbers = #tpu.dot_dimension_numbers<[1], [0], [0], [1], [0, 0, 1, 1], [], []>} : vector<8x4xf32>, vector<4x8xf32>, vector<8x8xf32> -> vector<8x8xf32>
    %cst_90 = arith.constant dense<0xFF800000> : vector<8xf32>
    %314 = vector.multi_reduction <maximumf>, %313, %cst_90 [1] : vector<8x8xf32> to vector<8xf32>
    %315 = vector.shape_cast %314 : vector<8xf32> to vector<8x1xf32>
    %316 = vector.broadcast %315 : vector<8x1xf32> to vector<8x8xf32>
    %317 = arith.subf %313, %316 : vector<8x8xf32>
    %318 = math.exp %317 : vector<8x8xf32>
    %cst_91 = arith.constant dense<0.000000e+00> : vector<8xf32>
    %319 = vector.multi_reduction <add>, %318, %cst_91 [1] : vector<8x8xf32> to vector<8xf32>
    %320 = vector.shape_cast %319 : vector<8xf32> to vector<8x1xf32>
    %321 = tpu.reciprocal %320 {approx = true} : vector<8x1xf32> -> vector<8x1xf32>
    %322 = vector.broadcast %321 : vector<8x1xf32> to vector<8x8xf32>
    %323 = arith.mulf %318, %322 : vector<8x8xf32>
    %cst_92 = arith.constant dense<0.000000e+00> : vector<8x4xf32>
    %324 = tpu.matmul %323, %311, %cst_92 {dimension_numbers = #tpu.dot_dimension_numbers<[1], [0], [0], [1], [0, 0, 1, 1], [], []>} : vector<8x8xf32>, vector<8x4xf32>, vector<8x4xf32> -> vector<8x4xf32>
    %325 = vector.extract_strided_slice %9 {offsets = [28, 0], sizes = [4, 32], strides = [1, 1]} : vector<32x32xf32> to vector<4x32xf32>
    %cst_93 = arith.constant dense<0.000000e+00> : vector<8x32xf32>
    %326 = tpu.matmul %324, %325, %cst_93 {dimension_numbers = #tpu.dot_dimension_numbers<[1], [0], [0], [1], [0, 0, 1, 1], [], []>} : vector<8x4xf32>, vector<4x32xf32>, vector<8x32xf32> -> vector<8x32xf32>
    %327 = arith.addf %308, %326 : vector<8x32xf32>
    %328 = vector.broadcast %10 : vector<1x32xf32> to vector<8x32xf32>
    %329 = arith.addf %327, %328 : vector<8x32xf32>
    %c1 = arith.constant 1 : index
    %c0_94 = arith.constant 0 : index
    %c0_95 = arith.constant 0 : index
    %330 = vector.load %arg5[%c1, %c0_94, %c0_95] : memref<2x8x32xf32, #tpu.memory_space<vmem>>, vector<1x8x32xf32>
    %331 = vector.shape_cast %330 : vector<1x8x32xf32> to vector<8x32xf32>
    %332 = vector.shape_cast %329 : vector<8x32xf32> to vector<1x8x32xf32>
    tpu.vector_store %arg5[%c1, %c0_94, %c0_95], %332 {strides = array<i32>} : memref<2x8x32xf32, #tpu.memory_space<vmem>>, vector<1x8x32xf32>,
    return
  }
  func.func @transform_0(%arg0: i32) -> (i32, i32, i32) {
    %c0_i32 = arith.constant 0 : i32
    %c0_i32_0 = arith.constant 0 : i32
    %c0_i32_1 = arith.constant 0 : i32
    return %arg0, %c0_i32, %c0_i32_0 : i32, i32, i32
  }
  func.func @transform_1(%arg0: i32) -> (i32, i32) {
    %c0_i32 = arith.constant 0 : i32
    %c0_i32_0 = arith.constant 0 : i32
    %c0_i32_1 = arith.constant 0 : i32
    return %c0_i32, %c0_i32_0 : i32, i32
  }
  func.func @transform_2(%arg0: i32) -> (i32, i32) {
    %c0_i32 = arith.constant 0 : i32
    %c0_i32_0 = arith.constant 0 : i32
    %c0_i32_1 = arith.constant 0 : i32
    return %c0_i32, %c0_i32_0 : i32, i32
  }
  func.func @transform_3(%arg0: i32) -> (i32, i32) {
    %c0_i32 = arith.constant 0 : i32
    %c0_i32_0 = arith.constant 0 : i32
    %c0_i32_1 = arith.constant 0 : i32
    return %c0_i32, %c0_i32_0 : i32, i32
  }
  func.func @transform_4(%arg0: i32) -> (i32, i32, i32) {
    %c0_i32 = arith.constant 0 : i32
    %c0_i32_0 = arith.constant 0 : i32
    %c0_i32_1 = arith.constant 0 : i32
    return %arg0, %c0_i32, %c0_i32_0 : i32, i32, i32
  }
}

</mosaic_0001>

<llo_original>
// kernel: tpu_custom_call.1
$region0: #{tpu_custom_call.1}
  #allocation0 [shape = 'u32[]', space=smem, size = 0x4, offset = 0x4, fixed_abs, tag = 'smem constant byte address 0x4 - core index']
  #allocation1 [shape = 'u32[72,128]{1,0:T(1,128)}', space=vmem, size = 0x9000, scoped, tag = 'internal scratch']
  %s0 = inlined_call_operand.hbm [shape: f32[2,8,32], index: 0, kind: input, shape index: {}]
  %s1 = inlined_call_operand.hbm [shape: f32[32,96], index: 1, kind: input, shape index: {}]
  %s2 = inlined_call_operand.hbm [shape: f32[32,32], index: 2, kind: input, shape index: {}]
  %s3 = inlined_call_operand.vmem [shape: f32[1,32], index: 3, kind: input, shape index: {}]
  %s4 = inlined_call_operand.hbm [shape: f32[2,8,32], index: 4, kind: output, shape index: {}]
  %s5 = sld [smem:[#allocation0]]
  $region38: #{tpu_custom_call.1} parent=0
    _
  %s7 = ssub.s32 1, %s5
  %s8 = scalar_select 0, %s7, %s5
  $region1: #{tpu_custom_call.1} parent=0
    #allocation2 [shape = 'u8[8192]{0}', space=vmem, size = 0x2000, scoped, tag = 'input window, operand 0, single buffered']
    #allocation3 [shape = 's32[1]{0}', space=sflag, size = 0x4, scoped, tag = 'scoped memory for tpu_custom_call.1']
    #allocation4 [shape = 's32[1]{0}', space=sflag, size = 0x4, scoped, tag = 'scoped memory for tpu_custom_call.1']
    #allocation5 [shape = 'u8[16384]{0}', space=vmem, size = 0x4000, scoped, tag = 'input window, operand 1, single buffered']
    #allocation6 [shape = 's32[1]{0}', space=sflag, size = 0x4, scoped, tag = 'scoped memory for tpu_custom_call.1']
    #allocation7 [shape = 'u8[16384]{0}', space=vmem, size = 0x4000, scoped, tag = 'input window, operand 2, single buffered']
    #allocation8 [shape = 'u8[8192]{0}', space=vmem, size = 0x2000, scoped, tag = 'output window, operand 0, single buffered']
    %9 = vsyncpa [#allocation3], 0
    %10 = vsyncpa [#allocation6], 0
    %11 = vsyncpa [#allocation4], 0
    // Predicated region
    $region2: #{tpu_custom_call.1} parent=1 // pred_check
      _
    $region3: #{tpu_custom_call.1} parent=1 // pred_check_branch
      %13 = sbr.rel (0) target = $region5
    $region4: #{tpu_custom_call.1} parent=1 // pred_region
      %15 = vsyncadd [#allocation3], 0
      %s16 = sshll.u32 %s0, 4
      %s17 = int_to_ptr.hbm [resolvable:$true] %s16
      %s18 = sshll.u32 [#allocation2], 4
      %s19 = int_to_ptr.vmem [resolvable:$true] %s18
      %24 = dma.hbm_to_vmem [thread:$0]  %s17, 256, %s19, [#allocation3], 128, 128, 8
    $region5: #{tpu_custom_call.1} parent=1 // pred_fallthru
      _
    // Predicated region
    $region6: #{tpu_custom_call.1} parent=1 // pred_check
      _
    $region7: #{tpu_custom_call.1} parent=1 // pred_check_branch
      %26 = sbr.rel (0) target = $region9
    $region8: #{tpu_custom_call.1} parent=1 // pred_region
      %28 = vsyncadd [#allocation6], 0
      %s29 = sshll.u32 %s1, 4
      %s30 = int_to_ptr.hbm [resolvable:$true] %s29
      %s31 = sshll.u32 [#allocation5], 4
      %s32 = int_to_ptr.vmem [resolvable:$true] %s31
      %37 = dma.hbm_to_vmem [thread:$0]  %s30, 512, %s32, [#allocation6], 128, 128, 8
    $region9: #{tpu_custom_call.1} parent=1 // pred_fallthru
      _
    // Predicated region
    $region10: #{tpu_custom_call.1} parent=1 // pred_check
      _
    $region11: #{tpu_custom_call.1} parent=1 // pred_check_branch
      %39 = sbr.rel (0) target = $region13
    $region12: #{tpu_custom_call.1} parent=1 // pred_region
      %41 = vsyncadd [#allocation6], 0
      %s42 = sshll.u32 %s2, 4
      %s43 = int_to_ptr.hbm [resolvable:$true] %s42
      %s44 = sshll.u32 [#allocation7], 4
      %s45 = int_to_ptr.vmem [resolvable:$true] %s44
      %50 = dma.hbm_to_vmem [thread:$0]  %s43, 512, %s45, [#allocation6], 128, 128, 8
    $region13: #{tpu_custom_call.1} parent=1 // pred_fallthru
      _
    // Predicated region
    $region14: #{tpu_custom_call.1} parent=1 // pred_check
      _
    $region15: #{tpu_custom_call.1} parent=1 // pred_check_branch
      %52 = sbr.rel (0) target = $region17
    $region16: #{tpu_custom_call.1} parent=1 // pred_region
      _
    $region17: #{tpu_custom_call.1} parent=1 // pred_fallthru
      _
    // Predicated region
    $region18: #{tpu_custom_call.1} parent=1 // pred_check
      _
    $region19: #{tpu_custom_call.1} parent=1 // pred_check_branch
      %54 = sbr.rel (0) target = $region21
    $region20: #{tpu_custom_call.1} parent=1 // pred_region
      %56 = dma.done [#allocation3], 256
    $region21: #{tpu_custom_call.1} parent=1 // pred_fallthru
      _
    // Predicated region
    $region22: #{tpu_custom_call.1} parent=1 // pred_check
      _
    $region23: #{tpu_custom_call.1} parent=1 // pred_check_branch
      %58 = sbr.rel (0) target = $region25
    $region24: #{tpu_custom_call.1} parent=1 // pred_region
      %60 = dma.done [#allocation6], 512
    $region25: #{tpu_custom_call.1} parent=1 // pred_fallthru
      _
    // Predicated region
    $region26: #{tpu_custom_call.1} parent=1 // pred_check
      _
    $region27: #{tpu_custom_call.1} parent=1 // pred_check_branch
      %62 = sbr.rel (0) target = $region29
    $region28: #{tpu_custom_call.1} parent=1 // pred_region
      %64 = dma.done [#allocation6], 512
    $region29: #{tpu_custom_call.1} parent=1 // pred_fallthru
      _
    %v65 = vld [vmem:[#allocation2] sm:$0xff]
    %v66 = vld [vmem:[#allocation2 + $0x8] sm:$0xff]
    %v67 = vld [vmem:[#allocation5] sm:$0xff]
    %v68 = vld [vmem:[#allocation5 + $0x8] sm:$0xff]
    %v69 = vld [vmem:[#allocation5 + $0x10] sm:$0xff]
    %v70 = vld [vmem:[#allocation5 + $0x18] sm:$0xff]
    %vm71 = vcmask 261120
    %v73 = vsel %vm71, %v65, 0
    %v76 = vsel %vm71, %v66, 0
    %78 = vmatpush.msra.mxu0 0.0
    %79 = vmatpush.msra.mxu0 0.0
    %80 = vmatpush.msra.mxu0 0.0
    %81 = vmatpush.msra.mxu0 0.0
    %82 = vmatpush.msra.mxu0 0.0
    %83 = vmatpush.msra.mxu0 0.0
    %84 = vmatpush.msra.mxu0 0.0
    %85 = vmatpush.msra.mxu0 0.0
    %86 = vmatpush.msra.mxu0 0.0
    %87 = vmatpush.msra.mxu0 0.0
    %88 = vmatpush.msra.mxu0 0.0
    %89 = vmatpush.msra.mxu0 0.0
    %90 = vmatpush.msra.mxu0 %v70
    %91 = vmatpush.msra.mxu0 %v69
    %92 = vmatpush.msra.mxu0 %v68
    %93 = vmatpush.msra.mxu0 %v67
    %94 = vmatmul.f32.gmra.mxu0 %v73
    %v95 = vpop.f32.mrf.mxu0
    %v96 = vadd.f32 0.0, %v95
    %97 = vmatmul.f32.gmra.mxu0 %v76
    %v98 = vpop.f32.mrf.mxu0
    %v99 = vadd.f32 0.0, %v98
    %100 = vdwg.mxu0
    %v101 = vmul.f32 %v96, 0.17677669
    %v102 = vmul.f32 %v99, 0.17677669
    %v103 = vld [vmem:[#allocation7] sm:$0xff]
    %v104 = vld [vmem:[#allocation7 + $0x8] sm:$0xff]
    %v105 = vld [vmem:[#allocation7 + $0x10] sm:$0xff]
    %v106 = vld [vmem:[#allocation7 + $0x18] sm:$0xff]
    %v107 = vld [vmem:[%s3] sm:$0x1]
    %109 = vrot.lane.b32.xlu0 %v96, 96
    %v110 = vpop.permute.xlu0 %109
    %vm111 = vcmask 31744
    %v113 = vsel %vm111, %v101, 0
    %v115 = vsel %vm111, %v110, 0
    %117 = vmatpush.xpose.msra.mxu0 0.0
    %118 = vmatpush.xpose.msra.mxu0 0.0
    %119 = vmatpush.xpose.msra.mxu0 0.0
    %120 = vmatpush.xpose.msra.mxu0 0.0
    %121 = vmatpush.xpose.msra.mxu0 0.0
    %122 = vmatpush.xpose.msra.mxu0 0.0
    %123 = vmatpush.xpose.msra.mxu0 0.0
    %124 = vmatpush.xpose.msra.mxu0 0.0
    %125 = vmatpush.xpose.msra.mxu0 0.0
    %126 = vmatpush.xpose.msra.mxu0 0.0
    %127 = vmatpush.xpose.msra.mxu0 0.0
    %128 = vmatpush.xpose.msra.mxu0 0.0
    %129 = vmatpush.xpose.msra.mxu0 0.0
    %130 = vmatpush.xpose.msra.mxu0 0.0
    %131 = vmatpush.xpose.msra.mxu0 0.0
    %132 = vmatpush.xpose.msra.mxu0 %v115
    %133 = vmatmul.f32.gmra.mxu0 %v113
    %v134 = vpop.f32.mrf.mxu0
    %v135 = vadd.f32 0.0, %v134
    %136 = vdwg.mxu0
    %vm137 = vcmask 64512
    %v138 = vsel %vm137, %v135, -inf
    %139 = vmax.xlane.f32.xlu0 %v138
    %v140 = vpop.xlane.xlu0 %139
    %v141 = vsub.f32 %v135, %v140
    %v142 = vmul.f32 %v141, 1.442695
    %v143 = vpow.pop %v142
    %v144 = vsel %vm137, %v143, 0.0
    %145 = vadd.xlane.f32.xlu0 %v144
    %v146 = vpop.xlane.xlu0 %145
    %v147 = vrcp.pop %v146
    %v148 = vmul.f32 %v143, %v147
    %149 = vrot.lane.b32.xlu0 %v96, 64
    %v150 = vpop.permute.xlu0 %149
    %v153 = vsel %vm137, %v148, 0
    %155 = vmatpush.msra.mxu0 0.0
    %156 = vmatpush.msra.mxu0 0.0
    %157 = vmatpush.msra.mxu0 0.0
    %158 = vmatpush.msra.mxu0 0.0
    %159 = vmatpush.msra.mxu0 0.0
    %160 = vmatpush.msra.mxu0 0.0
    %161 = vmatpush.msra.mxu0 0.0
    %162 = vmatpush.msra.mxu0 0.0
    %163 = vmatpush.msra.mxu0 0.0
    %164 = vmatpush.msra.mxu0 0.0
    %165 = vmatpush.msra.mxu0 0.0
    %166 = vmatpush.msra.mxu0 0.0
    %167 = vmatpush.msra.mxu0 0.0
    %168 = vmatpush.msra.mxu0 0.0
    %169 = vmatpush.msra.mxu0 0.0
    %170 = vmatpush.msra.mxu0 %v150
    %171 = vmatmul.f32.gmra.mxu0 %v153
    %v172 = vpop.f32.mrf.mxu0
    %v173 = vadd.f32 0.0, %v172
    %174 = vdwg.mxu0
    %175 = vrot.lane.b32.xlu0 %v101, 124
    %v176 = vpop.permute.xlu0 %175
    %177 = vrot.lane.b32.xlu0 %v96, 92
    %v178 = vpop.permute.xlu0 %177
    %v179 = vsel %vm111, %v176, 0
    %v181 = vsel %vm111, %v178, 0
    %183 = vmatpush.xpose.msra.mxu0 0.0
    %184 = vmatpush.xpose.msra.mxu0 0.0
    %185 = vmatpush.xpose.msra.mxu0 0.0
    %186 = vmatpush.xpose.msra.mxu0 0.0
    %187 = vmatpush.xpose.msra.mxu0 0.0
    %188 = vmatpush.xpose.msra.mxu0 0.0
    %189 = vmatpush.xpose.msra.mxu0 0.0
    %190 = vmatpush.xpose.msra.mxu0 0.0
    %191 = vmatpush.xpose.msra.mxu0 0.0
    %192 = vmatpush.xpose.msra.mxu0 0.0
    %193 = vmatpush.xpose.msra.mxu0 0.0
    %194 = vmatpush.xpose.msra.mxu0 0.0
    %195 = vmatpush.xpose.msra.mxu0 0.0
    %196 = vmatpush.xpose.msra.mxu0 0.0
    %197 = vmatpush.xpose.msra.mxu0 0.0
    %198 = vmatpush.xpose.msra.mxu0 %v181
    %199 = vmatmul.f32.gmra.mxu0 %v179
    %v200 = vpop.f32.mrf.mxu0
    %v201 = vadd.f32 0.0, %v200
    %202 = vdwg.mxu0
    %v203 = vsel %vm137, %v201, -inf
    %204 = vmax.xlane.f32.xlu0 %v203
    %v205 = vpop.xlane.xlu0 %204
    %v206 = vsub.f32 %v201, %v205
    %v207 = vmul.f32 %v206, 1.442695
    %v208 = vpow.pop %v207
    %v209 = vsel %vm137, %v208, 0.0
    %210 = vadd.xlane.f32.xlu0 %v209
    %v211 = vpop.xlane.xlu0 %210
    %v212 = vrcp.pop %v211
    %v213 = vmul.f32 %v208, %v212
    %214 = vrot.lane.b32.xlu0 %v96, 60
    %v215 = vpop.permute.xlu0 %214
    %v218 = vsel %vm137, %v213, 0
    %220 = vmatpush.msra.mxu0 0.0
    %221 = vmatpush.msra.mxu0 0.0
    %222 = vmatpush.msra.mxu0 0.0
    %223 = vmatpush.msra.mxu0 0.0
    %224 = vmatpush.msra.mxu0 0.0
    %225 = vmatpush.msra.mxu0 0.0
    %226 = vmatpush.msra.mxu0 0.0
    %227 = vmatpush.msra.mxu0 0.0
    %228 = vmatpush.msra.mxu0 0.0
    %229 = vmatpush.msra.mxu0 0.0
    %230 = vmatpush.msra.mxu0 0.0
    %231 = vmatpush.msra.mxu0 0.0
    %232 = vmatpush.msra.mxu0 0.0
    %233 = vmatpush.msra.mxu0 0.0
    %234 = vmatpush.msra.mxu0 0.0
    %235 = vmatpush.msra.mxu0 %v215
    %236 = vmatmul.f32.gmra.mxu0 %v218
    %v237 = vpop.f32.mrf.mxu0
    %v238 = vadd.f32 0.0, %v237
    %239 = vdwg.mxu0
    %v241 = vrot.slane %v103, 4
    %v243 = vsel %vm111, %v238, 0
    %vm245 = vcmask 1043456
    %v246 = vsel %vm245, %v241, 0
    %248 = vmatpush.msra.mxu0 0.0
    %249 = vmatpush.msra.mxu0 0.0
    %250 = vmatpush.msra.mxu0 0.0
    %251 = vmatpush.msra.mxu0 0.0
    %252 = vmatpush.msra.mxu0 0.0
    %253 = vmatpush.msra.mxu0 0.0
    %254 = vmatpush.msra.mxu0 0.0
    %255 = vmatpush.msra.mxu0 0.0
    %256 = vmatpush.msra.mxu0 0.0
    %257 = vmatpush.msra.mxu0 0.0
    %258 = vmatpush.msra.mxu0 0.0
    %259 = vmatpush.msra.mxu0 0.0
    %260 = vmatpush.msra.mxu0 0.0
    %261 = vmatpush.msra.mxu0 0.0
    %262 = vmatpush.msra.mxu0 0.0
    %263 = vmatpush.msra.mxu0 %v246
    %264 = vmatmul.f32.gmra.mxu0 %v243
    %v265 = vpop.f32.mrf.mxu0
    %v266 = vadd.f32 0.0, %v265
    %267 = vdwg.mxu0
    %v269 = vsel %vm111, %v173, 0
    %v271 = vsel %vm245, %v103, 0
    %273 = vmatpush.msra.mxu0 0.0
    %274 = vmatpush.msra.mxu0 0.0
    %275 = vmatpush.msra.mxu0 0.0
    %276 = vmatpush.msra.mxu0 0.0
    %277 = vmatpush.msra.mxu0 0.0
    %278 = vmatpush.msra.mxu0 0.0
    %279 = vmatpush.msra.mxu0 0.0
    %280 = vmatpush.msra.mxu0 0.0
    %281 = vmatpush.msra.mxu0 0.0
    %282 = vmatpush.msra.mxu0 0.0
    %283 = vmatpush.msra.mxu0 0.0
    %284 = vmatpush.msra.mxu0 0.0
    %285 = vmatpush.msra.mxu0 0.0
    %286 = vmatpush.msra.mxu0 0.0
    %287 = vmatpush.msra.mxu0 0.0
    %288 = vmatpush.msra.mxu0 %v271
    %289 = vmatmul.f32.gmra.mxu0 %v269
    %v290 = vpop.f32.mrf.mxu0
    %v291 = vadd.f32 %v266, %v290
    %292 = vdwg.mxu0
    %293 = vrot.lane.b32.xlu0 %v101, 120
    %v294 = vpop.permute.xlu0 %293
    %295 = vrot.lane.b32.xlu0 %v96, 88
    %v296 = vpop.permute.xlu0 %295
    %v297 = vsel %vm111, %v294, 0
    %v299 = vsel %vm111, %v296, 0
    %301 = vmatpush.xpose.msra.mxu0 0.0
    %302 = vmatpush.xpose.msra.mxu0 0.0
    %303 = vmatpush.xpose.msra.mxu0 0.0
    %304 = vmatpush.xpose.msra.mxu0 0.0
    %305 = vmatpush.xpose.msra.mxu0 0.0
    %306 = vmatpush.xpose.msra.mxu0 0.0
    %307 = vmatpush.xpose.msra.mxu0 0.0
    %308 = vmatpush.xpose.msra.mxu0 0.0
    %309 = vmatpush.xpose.msra.mxu0 0.0
    %310 = vmatpush.xpose.msra.mxu0 0.0
    %311 = vmatpush.xpose.msra.mxu0 0.0
    %312 = vmatpush.xpose.msra.mxu0 0.0
    %313 = vmatpush.xpose.msra.mxu0 0.0
    %314 = vmatpush.xpose.msra.mxu0 0.0
    %315 = vmatpush.xpose.msra.mxu0 0.0
    %316 = vmatpush.xpose.msra.mxu0 %v299
    %317 = vmatmul.f32.gmra.mxu0 %v297
    %v318 = vpop.f32.mrf.mxu0
    %v319 = vadd.f32 0.0, %v318
    %320 = vdwg.mxu0
    %v321 = vsel %vm137, %v319, -inf
    %322 = vmax.xlane.f32.xlu0 %v321
    %v323 = vpop.xlane.xlu0 %322
    %v324 = vsub.f32 %v319, %v323
    %v325 = vmul.f32 %v324, 1.442695
    %v326 = vpow.pop %v325
    %v327 = vsel %vm137, %v326, 0.0
    %328 = vadd.xlane.f32.xlu0 %v327
    %v329 = vpop.xlane.xlu0 %328
    %v330 = vrcp.pop %v329
    %v331 = vmul.f32 %v326, %v330
    %332 = vrot.lane.b32.xlu0 %v96, 56
    %v333 = vpop.permute.xlu0 %332
    %v336 = vsel %vm137, %v331, 0
    %338 = vmatpush.msra.mxu0 0.0
    %339 = vmatpush.msra.mxu0 0.0
    %340 = vmatpush.msra.mxu0 0.0
    %341 = vmatpush.msra.mxu0 0.0
    %342 = vmatpush.msra.mxu0 0.0
    %343 = vmatpush.msra.mxu0 0.0
    %344 = vmatpush.msra.mxu0 0.0
    %345 = vmatpush.msra.mxu0 0.0
    %346 = vmatpush.msra.mxu0 0.0
    %347 = vmatpush.msra.mxu0 0.0
    %348 = vmatpush.msra.mxu0 0.0
    %349 = vmatpush.msra.mxu0 0.0
    %350 = vmatpush.msra.mxu0 0.0
    %351 = vmatpush.msra.mxu0 0.0
    %352 = vmatpush.msra.mxu0 0.0
    %353 = vmatpush.msra.mxu0 %v333
    %354 = vmatmul.f32.gmra.mxu0 %v336
    %v355 = vpop.f32.mrf.mxu0
    %v356 = vadd.f32 0.0, %v355
    %357 = vdwg.mxu0
    %v359 = vsel %vm111, %v356, 0
    %v362 = vsel %vm245, %v104, 0
    %364 = vmatpush.msra.mxu0 0.0
    %365 = vmatpush.msra.mxu0 0.0
    %366 = vmatpush.msra.mxu0 0.0
    %367 = vmatpush.msra.mxu0 0.0
    %368 = vmatpush.msra.mxu0 0.0
    %369 = vmatpush.msra.mxu0 0.0
    %370 = vmatpush.msra.mxu0 0.0
    %371 = vmatpush.msra.mxu0 0.0
    %372 = vmatpush.msra.mxu0 0.0
    %373 = vmatpush.msra.mxu0 0.0
    %374 = vmatpush.msra.mxu0 0.0
    %375 = vmatpush.msra.mxu0 0.0
    %376 = vmatpush.msra.mxu0 0.0
    %377 = vmatpush.msra.mxu0 0.0
    %378 = vmatpush.msra.mxu0 0.0
    %379 = vmatpush.msra.mxu0 %v362
    %380 = vmatmul.f32.gmra.mxu0 %v359
    %v381 = vpop.f32.mrf.mxu0
    %v382 = vadd.f32 0.0, %v381
    %383 = vdwg.mxu0
    %v384 = vadd.f32 %v291, %v382
    %385 = vrot.lane.b32.xlu0 %v101, 116
    %v386 = vpop.permute.xlu0 %385
    %387 = vrot.lane.b32.xlu0 %v96, 84
    %v388 = vpop.permute.xlu0 %387
    %v389 = vsel %vm111, %v386, 0
    %v391 = vsel %vm111, %v388, 0
    %393 = vmatpush.xpose.msra.mxu0 0.0
    %394 = vmatpush.xpose.msra.mxu0 0.0
    %395 = vmatpush.xpose.msra.mxu0 0.0
    %396 = vmatpush.xpose.msra.mxu0 0.0
    %397 = vmatpush.xpose.msra.mxu0 0.0
    %398 = vmatpush.xpose.msra.mxu0 0.0
    %399 = vmatpush.xpose.msra.mxu0 0.0
    %400 = vmatpush.xpose.msra.mxu0 0.0
    %401 = vmatpush.xpose.msra.mxu0 0.0
    %402 = vmatpush.xpose.msra.mxu0 0.0
    %403 = vmatpush.xpose.msra.mxu0 0.0
    %404 = vmatpush.xpose.msra.mxu0 0.0
    %405 = vmatpush.xpose.msra.mxu0 0.0
    %406 = vmatpush.xpose.msra.mxu0 0.0
    %407 = vmatpush.xpose.msra.mxu0 0.0
    %408 = vmatpush.xpose.msra.mxu0 %v391
    %409 = vmatmul.f32.gmra.mxu0 %v389
    %v410 = vpop.f32.mrf.mxu0
    %v411 = vadd.f32 0.0, %v410
    %412 = vdwg.mxu0
    %v413 = vsel %vm137, %v411, -inf
    %414 = vmax.xlane.f32.xlu0 %v413
    %v415 = vpop.xlane.xlu0 %414
    %v416 = vsub.f32 %v411, %v415
    %v417 = vmul.f32 %v416, 1.442695
    %v418 = vpow.pop %v417
    %v419 = vsel %vm137, %v418, 0.0
    %420 = vadd.xlane.f32.xlu0 %v419
    %v421 = vpop.xlane.xlu0 %420
    %v422 = vrcp.pop %v421
    %v423 = vmul.f32 %v418, %v422
    %424 = vrot.lane.b32.xlu0 %v96, 52
    %v425 = vpop.permute.xlu0 %424
    %v428 = vsel %vm137, %v423, 0
    %430 = vmatpush.msra.mxu0 0.0
    %431 = vmatpush.msra.mxu0 0.0
    %432 = vmatpush.msra.mxu0 0.0
    %433 = vmatpush.msra.mxu0 0.0
    %434 = vmatpush.msra.mxu0 0.0
    %435 = vmatpush.msra.mxu0 0.0
    %436 = vmatpush.msra.mxu0 0.0
    %437 = vmatpush.msra.mxu0 0.0
    %438 = vmatpush.msra.mxu0 0.0
    %439 = vmatpush.msra.mxu0 0.0
    %440 = vmatpush.msra.mxu0 0.0
    %441 = vmatpush.msra.mxu0 0.0
    %442 = vmatpush.msra.mxu0 0.0
    %443 = vmatpush.msra.mxu0 0.0
    %444 = vmatpush.msra.mxu0 0.0
    %445 = vmatpush.msra.mxu0 %v425
    %446 = vmatmul.f32.gmra.mxu0 %v428
    %v447 = vpop.f32.mrf.mxu0
    %v448 = vadd.f32 0.0, %v447
    %449 = vdwg.mxu0
    %v450 = vrot.slane %v104, 4
    %v452 = vsel %vm111, %v448, 0
    %v454 = vsel %vm245, %v450, 0
    %456 = vmatpush.msra.mxu0 0.0
    %457 = vmatpush.msra.mxu0 0.0
    %458 = vmatpush.msra.mxu0 0.0
    %459 = vmatpush.msra.mxu0 0.0
    %460 = vmatpush.msra.mxu0 0.0
    %461 = vmatpush.msra.mxu0 0.0
    %462 = vmatpush.msra.mxu0 0.0
    %463 = vmatpush.msra.mxu0 0.0
    %464 = vmatpush.msra.mxu0 0.0
    %465 = vmatpush.msra.mxu0 0.0
    %466 = vmatpush.msra.mxu0 0.0
    %467 = vmatpush.msra.mxu0 0.0
    %468 = vmatpush.msra.mxu0 0.0
    %469 = vmatpush.msra.mxu0 0.0
    %470 = vmatpush.msra.mxu0 0.0
    %471 = vmatpush.msra.mxu0 %v454
    %472 = vmatmul.f32.gmra.mxu0 %v452
    %v473 = vpop.f32.mrf.mxu0
    %v474 = vadd.f32 0.0, %v473
    %475 = vdwg.mxu0
    %v476 = vadd.f32 %v384, %v474
    %477 = vrot.lane.b32.xlu0 %v101, 112
    %v478 = vpop.permute.xlu0 %477
    %479 = vrot.lane.b32.xlu0 %v96, 80
    %v480 = vpop.permute.xlu0 %479
    %v481 = vsel %vm111, %v478, 0
    %v483 = vsel %vm111, %v480, 0
    %485 = vmatpush.xpose.msra.mxu0 0.0
    %486 = vmatpush.xpose.msra.mxu0 0.0
    %487 = vmatpush.xpose.msra.mxu0 0.0
    %488 = vmatpush.xpose.msra.mxu0 0.0
    %489 = vmatpush.xpose.msra.mxu0 0.0
    %490 = vmatpush.xpose.msra.mxu0 0.0
    %491 = vmatpush.xpose.msra.mxu0 0.0
    %492 = vmatpush.xpose.msra.mxu0 0.0
    %493 = vmatpush.xpose.msra.mxu0 0.0
    %494 = vmatpush.xpose.msra.mxu0 0.0
    %495 = vmatpush.xpose.msra.mxu0 0.0
    %496 = vmatpush.xpose.msra.mxu0 0.0
    %497 = vmatpush.xpose.msra.mxu0 0.0
    %498 = vmatpush.xpose.msra.mxu0 0.0
    %499 = vmatpush.xpose.msra.mxu0 0.0
    %500 = vmatpush.xpose.msra.mxu0 %v483
    %501 = vmatmul.f32.gmra.mxu0 %v481
    %v502 = vpop.f32.mrf.mxu0
    %v503 = vadd.f32 0.0, %v502
    %504 = vdwg.mxu0
    %v505 = vsel %vm137, %v503, -inf
    %506 = vmax.xlane.f32.xlu0 %v505
    %v507 = vpop.xlane.xlu0 %506
    %v508 = vsub.f32 %v503, %v507
    %v509 = vmul.f32 %v508, 1.442695
    %v510 = vpow.pop %v509
    %v511 = vsel %vm137, %v510, 0.0
    %512 = vadd.xlane.f32.xlu0 %v511
    %v513 = vpop.xlane.xlu0 %512
    %v514 = vrcp.pop %v513
    %v515 = vmul.f32 %v510, %v514
    %516 = vrot.lane.b32.xlu0 %v96, 48
    %v517 = vpop.permute.xlu0 %516
    %v520 = vsel %vm137, %v515, 0
    %522 = vmatpush.msra.mxu0 0.0
    %523 = vmatpush.msra.mxu0 0.0
    %524 = vmatpush.msra.mxu0 0.0
    %525 = vmatpush.msra.mxu0 0.0
    %526 = vmatpush.msra.mxu0 0.0
    %527 = vmatpush.msra.mxu0 0.0
    %528 = vmatpush.msra.mxu0 0.0
    %529 = vmatpush.msra.mxu0 0.0
    %530 = vmatpush.msra.mxu0 0.0
    %531 = vmatpush.msra.mxu0 0.0
    %532 = vmatpush.msra.mxu0 0.0
    %533 = vmatpush.msra.mxu0 0.0
    %534 = vmatpush.msra.mxu0 0.0
    %535 = vmatpush.msra.mxu0 0.0
    %536 = vmatpush.msra.mxu0 0.0
    %537 = vmatpush.msra.mxu0 %v517
    %538 = vmatmul.f32.gmra.mxu0 %v520
    %v539 = vpop.f32.mrf.mxu0
    %v540 = vadd.f32 0.0, %v539
    %541 = vdwg.mxu0
    %v543 = vsel %vm111, %v540, 0
    %v546 = vsel %vm245, %v105, 0
    %548 = vmatpush.msra.mxu0 0.0
    %549 = vmatpush.msra.mxu0 0.0
    %550 = vmatpush.msra.mxu0 0.0
    %551 = vmatpush.msra.mxu0 0.0
    %552 = vmatpush.msra.mxu0 0.0
    %553 = vmatpush.msra.mxu0 0.0
    %554 = vmatpush.msra.mxu0 0.0
    %555 = vmatpush.msra.mxu0 0.0
    %556 = vmatpush.msra.mxu0 0.0
    %557 = vmatpush.msra.mxu0 0.0
    %558 = vmatpush.msra.mxu0 0.0
    %559 = vmatpush.msra.mxu0 0.0
    %560 = vmatpush.msra.mxu0 0.0
    %561 = vmatpush.msra.mxu0 0.0
    %562 = vmatpush.msra.mxu0 0.0
    %563 = vmatpush.msra.mxu0 %v546
    %564 = vmatmul.f32.gmra.mxu0 %v543
    %v565 = vpop.f32.mrf.mxu0
    %v566 = vadd.f32 0.0, %v565
    %567 = vdwg.mxu0
    %v568 = vadd.f32 %v476, %v566
    %569 = vrot.lane.b32.xlu0 %v101, 108
    %v570 = vpop.permute.xlu0 %569
    %571 = vrot.lane.b32.xlu0 %v96, 76
    %v572 = vpop.permute.xlu0 %571
    %v573 = vsel %vm111, %v570, 0
    %v575 = vsel %vm111, %v572, 0
    %577 = vmatpush.xpose.msra.mxu0 0.0
    %578 = vmatpush.xpose.msra.mxu0 0.0
    %579 = vmatpush.xpose.msra.mxu0 0.0
    %580 = vmatpush.xpose.msra.mxu0 0.0
    %581 = vmatpush.xpose.msra.mxu0 0.0
    %582 = vmatpush.xpose.msra.mxu0 0.0
    %583 = vmatpush.xpose.msra.mxu0 0.0
    %584 = vmatpush.xpose.msra.mxu0 0.0
    %585 = vmatpush.xpose.msra.mxu0 0.0
    %586 = vmatpush.xpose.msra.mxu0 0.0
    %587 = vmatpush.xpose.msra.mxu0 0.0
    %588 = vmatpush.xpose.msra.mxu0 0.0
    %589 = vmatpush.xpose.msra.mxu0 0.0
    %590 = vmatpush.xpose.msra.mxu0 0.0
    %591 = vmatpush.xpose.msra.mxu0 0.0
    %592 = vmatpush.xpose.msra.mxu0 %v575
    %593 = vmatmul.f32.gmra.mxu0 %v573
    %v594 = vpop.f32.mrf.mxu0
    %v595 = vadd.f32 0.0, %v594
    %596 = vdwg.mxu0
    %v597 = vsel %vm137, %v595, -inf
    %598 = vmax.xlane.f32.xlu0 %v597
    %v599 = vpop.xlane.xlu0 %598
    %v600 = vsub.f32 %v595, %v599
    %v601 = vmul.f32 %v600, 1.442695
    %v602 = vpow.pop %v601
    %v603 = vsel %vm137, %v602, 0.0
    %604 = vadd.xlane.f32.xlu0 %v603
    %v605 = vpop.xlane.xlu0 %604
    %v606 = vrcp.pop %v605
    %v607 = vmul.f32 %v602, %v606
    %608 = vrot.lane.b32.xlu0 %v96, 44
    %v609 = vpop.permute.xlu0 %608
    %v612 = vsel %vm137, %v607, 0
    %614 = vmatpush.msra.mxu0 0.0
    %615 = vmatpush.msra.mxu0 0.0
    %616 = vmatpush.msra.mxu0 0.0
    %617 = vmatpush.msra.mxu0 0.0
    %618 = vmatpush.msra.mxu0 0.0
    %619 = vmatpush.msra.mxu0 0.0
    %620 = vmatpush.msra.mxu0 0.0
    %621 = vmatpush.msra.mxu0 0.0
    %622 = vmatpush.msra.mxu0 0.0
    %623 = vmatpush.msra.mxu0 0.0
    %624 = vmatpush.msra.mxu0 0.0
    %625 = vmatpush.msra.mxu0 0.0
    %626 = vmatpush.msra.mxu0 0.0
    %627 = vmatpush.msra.mxu0 0.0
    %628 = vmatpush.msra.mxu0 0.0
    %629 = vmatpush.msra.mxu0 %v609
    %630 = vmatmul.f32.gmra.mxu0 %v612
    %v631 = vpop.f32.mrf.mxu0
    %v632 = vadd.f32 0.0, %v631
    %633 = vdwg.mxu0
    %v634 = vrot.slane %v105, 4
    %v636 = vsel %vm111, %v632, 0
    %v638 = vsel %vm245, %v634, 0
    %640 = vmatpush.msra.mxu0 0.0
    %641 = vmatpush.msra.mxu0 0.0
    %642 = vmatpush.msra.mxu0 0.0
    %643 = vmatpush.msra.mxu0 0.0
    %644 = vmatpush.msra.mxu0 0.0
    %645 = vmatpush.msra.mxu0 0.0
    %646 = vmatpush.msra.mxu0 0.0
    %647 = vmatpush.msra.mxu0 0.0
    %648 = vmatpush.msra.mxu0 0.0
    %649 = vmatpush.msra.mxu0 0.0
    %650 = vmatpush.msra.mxu0 0.0
    %651 = vmatpush.msra.mxu0 0.0
    %652 = vmatpush.msra.mxu0 0.0
    %653 = vmatpush.msra.mxu0 0.0
    %654 = vmatpush.msra.mxu0 0.0
    %655 = vmatpush.msra.mxu0 %v638
    %656 = vmatmul.f32.gmra.mxu0 %v636
    %v657 = vpop.f32.mrf.mxu0
    %v658 = vadd.f32 0.0, %v657
    %659 = vdwg.mxu0
    %v660 = vadd.f32 %v568, %v658
    %661 = vrot.lane.b32.xlu0 %v101, 104
    %v662 = vpop.permute.xlu0 %661
    %663 = vrot.lane.b32.xlu0 %v96, 72
    %v664 = vpop.permute.xlu0 %663
    %v665 = vsel %vm111, %v662, 0
    %v667 = vsel %vm111, %v664, 0
    %669 = vmatpush.xpose.msra.mxu0 0.0
    %670 = vmatpush.xpose.msra.mxu0 0.0
    %671 = vmatpush.xpose.msra.mxu0 0.0
    %672 = vmatpush.xpose.msra.mxu0 0.0
    %673 = vmatpush.xpose.msra.mxu0 0.0
    %674 = vmatpush.xpose.msra.mxu0 0.0
    %675 = vmatpush.xpose.msra.mxu0 0.0
    %676 = vmatpush.xpose.msra.mxu0 0.0
    %677 = vmatpush.xpose.msra.mxu0 0.0
    %678 = vmatpush.xpose.msra.mxu0 0.0
    %679 = vmatpush.xpose.msra.mxu0 0.0
    %680 = vmatpush.xpose.msra.mxu0 0.0
    %681 = vmatpush.xpose.msra.mxu0 0.0
    %682 = vmatpush.xpose.msra.mxu0 0.0
    %683 = vmatpush.xpose.msra.mxu0 0.0
    %684 = vmatpush.xpose.msra.mxu0 %v667
    %685 = vmatmul.f32.gmra.mxu0 %v665
    %v686 = vpop.f32.mrf.mxu0
    %v687 = vadd.f32 0.0, %v686
    %688 = vdwg.mxu0
    %v689 = vsel %vm137, %v687, -inf
    %690 = vmax.xlane.f32.xlu0 %v689
    %v691 = vpop.xlane.xlu0 %690
    %v692 = vsub.f32 %v687, %v691
    %v693 = vmul.f32 %v692, 1.442695
    %v694 = vpow.pop %v693
    %v695 = vsel %vm137, %v694, 0.0
    %696 = vadd.xlane.f32.xlu0 %v695
    %v697 = vpop.xlane.xlu0 %696
    %v698 = vrcp.pop %v697
    %v699 = vmul.f32 %v694, %v698
    %700 = vrot.lane.b32.xlu0 %v96, 40
    %v701 = vpop.permute.xlu0 %700
    %v704 = vsel %vm137, %v699, 0
    %706 = vmatpush.msra.mxu0 0.0
    %707 = vmatpush.msra.mxu0 0.0
    %708 = vmatpush.msra.mxu0 0.0
    %709 = vmatpush.msra.mxu0 0.0
    %710 = vmatpush.msra.mxu0 0.0
    %711 = vmatpush.msra.mxu0 0.0
    %712 = vmatpush.msra.mxu0 0.0
    %713 = vmatpush.msra.mxu0 0.0
    %714 = vmatpush.msra.mxu0 0.0
    %715 = vmatpush.msra.mxu0 0.0
    %716 = vmatpush.msra.mxu0 0.0
    %717 = vmatpush.msra.mxu0 0.0
    %718 = vmatpush.msra.mxu0 0.0
    %719 = vmatpush.msra.mxu0 0.0
    %720 = vmatpush.msra.mxu0 0.0
    %721 = vmatpush.msra.mxu0 %v701
    %722 = vmatmul.f32.gmra.mxu0 %v704
    %v723 = vpop.f32.mrf.mxu0
    %v724 = vadd.f32 0.0, %v723
    %725 = vdwg.mxu0
    %v727 = vsel %vm111, %v724, 0
    %v730 = vsel %vm245, %v106, 0
    %732 = vmatpush.msra.mxu0 0.0
    %733 = vmatpush.msra.mxu0 0.0
    %734 = vmatpush.msra.mxu0 0.0
    %735 = vmatpush.msra.mxu0 0.0
    %736 = vmatpush.msra.mxu0 0.0
    %737 = vmatpush.msra.mxu0 0.0
    %738 = vmatpush.msra.mxu0 0.0
    %739 = vmatpush.msra.mxu0 0.0
    %740 = vmatpush.msra.mxu0 0.0
    %741 = vmatpush.msra.mxu0 0.0
    %742 = vmatpush.msra.mxu0 0.0
    %743 = vmatpush.msra.mxu0 0.0
    %744 = vmatpush.msra.mxu0 0.0
    %745 = vmatpush.msra.mxu0 0.0
    %746 = vmatpush.msra.mxu0 0.0
    %747 = vmatpush.msra.mxu0 %v730
    %748 = vmatmul.f32.gmra.mxu0 %v727
    %v749 = vpop.f32.mrf.mxu0
    %v750 = vadd.f32 0.0, %v749
    %751 = vdwg.mxu0
    %v752 = vadd.f32 %v660, %v750
    %753 = vrot.lane.b32.xlu0 %v101, 100
    %v754 = vpop.permute.xlu0 %753
    %755 = vrot.lane.b32.xlu0 %v96, 68
    %v756 = vpop.permute.xlu0 %755
    %v757 = vsel %vm111, %v754, 0
    %v759 = vsel %vm111, %v756, 0
    %761 = vmatpush.xpose.msra.mxu0 0.0
    %762 = vmatpush.xpose.msra.mxu0 0.0
    %763 = vmatpush.xpose.msra.mxu0 0.0
    %764 = vmatpush.xpose.msra.mxu0 0.0
    %765 = vmatpush.xpose.msra.mxu0 0.0
    %766 = vmatpush.xpose.msra.mxu0 0.0
    %767 = vmatpush.xpose.msra.mxu0 0.0
    %768 = vmatpush.xpose.msra.mxu0 0.0
    %769 = vmatpush.xpose.msra.mxu0 0.0
    %770 = vmatpush.xpose.msra.mxu0 0.0
    %771 = vmatpush.xpose.msra.mxu0 0.0
    %772 = vmatpush.xpose.msra.mxu0 0.0
    %773 = vmatpush.xpose.msra.mxu0 0.0
    %774 = vmatpush.xpose.msra.mxu0 0.0
    %775 = vmatpush.xpose.msra.mxu0 0.0
    %776 = vmatpush.xpose.msra.mxu0 %v759
    %777 = vmatmul.f32.gmra.mxu0 %v757
    %v778 = vpop.f32.mrf.mxu0
    %v779 = vadd.f32 0.0, %v778
    %780 = vdwg.mxu0
    %v781 = vsel %vm137, %v779, -inf
    %782 = vmax.xlane.f32.xlu0 %v781
    %v783 = vpop.xlane.xlu0 %782
    %v784 = vsub.f32 %v779, %v783
    %v785 = vmul.f32 %v784, 1.442695
    %v786 = vpow.pop %v785
    %v787 = vsel %vm137, %v786, 0.0
    %788 = vadd.xlane.f32.xlu0 %v787
    %v789 = vpop.xlane.xlu0 %788
    %v790 = vrcp.pop %v789
    %v791 = vmul.f32 %v786, %v790
    %792 = vrot.lane.b32.xlu0 %v96, 36
    %v793 = vpop.permute.xlu0 %792
    %v796 = vsel %vm137, %v791, 0
    %798 = vmatpush.msra.mxu0 0.0
    %799 = vmatpush.msra.mxu0 0.0
    %800 = vmatpush.msra.mxu0 0.0
    %801 = vmatpush.msra.mxu0 0.0
    %802 = vmatpush.msra.mxu0 0.0
    %803 = vmatpush.msra.mxu0 0.0
    %804 = vmatpush.msra.mxu0 0.0
    %805 = vmatpush.msra.mxu0 0.0
    %806 = vmatpush.msra.mxu0 0.0
    %807 = vmatpush.msra.mxu0 0.0
    %808 = vmatpush.msra.mxu0 0.0
    %809 = vmatpush.msra.mxu0 0.0
    %810 = vmatpush.msra.mxu0 0.0
    %811 = vmatpush.msra.mxu0 0.0
    %812 = vmatpush.msra.mxu0 0.0
    %813 = vmatpush.msra.mxu0 %v793
    %814 = vmatmul.f32.gmra.mxu0 %v796
    %v815 = vpop.f32.mrf.mxu0
    %v816 = vadd.f32 0.0, %v815
    %817 = vdwg.mxu0
    %v818 = vrot.slane %v106, 4
    %v820 = vsel %vm111, %v816, 0
    %v822 = vsel %vm245, %v818, 0
    %824 = vmatpush.msra.mxu0 0.0
    %825 = vmatpush.msra.mxu0 0.0
    %826 = vmatpush.msra.mxu0 0.0
    %827 = vmatpush.msra.mxu0 0.0
    %828 = vmatpush.msra.mxu0 0.0
    %829 = vmatpush.msra.mxu0 0.0
    %830 = vmatpush.msra.mxu0 0.0
    %831 = vmatpush.msra.mxu0 0.0
    %832 = vmatpush.msra.mxu0 0.0
    %833 = vmatpush.msra.mxu0 0.0
    %834 = vmatpush.msra.mxu0 0.0
    %835 = vmatpush.msra.mxu0 0.0
    %836 = vmatpush.msra.mxu0 0.0
    %837 = vmatpush.msra.mxu0 0.0
    %838 = vmatpush.msra.mxu0 0.0
    %839 = vmatpush.msra.mxu0 %v822
    %840 = vmatmul.f32.gmra.mxu0 %v820
    %v841 = vpop.f32.mrf.mxu0
    %v842 = vadd.f32 0.0, %v841
    %843 = vdwg.mxu0
    %v844 = vadd.f32 %v752, %v842
    %v846 = vperm.slane %v107, 0
    %v848 = vadd.f32 %v844, %v846
    %849 = vst.msk [vmem:[#allocation8] sm:$0xff] %vm71, %v848
    %851 = vrot.lane.b32.xlu0 %v99, 96
    %v852 = vpop.permute.xlu0 %851
    %v854 = vsel %vm111, %v102, 0
    %v856 = vsel %vm111, %v852, 0
    %858 = vmatpush.xpose.msra.mxu0 0.0
    %859 = vmatpush.xpose.msra.mxu0 0.0
    %860 = vmatpush.xpose.msra.mxu0 0.0
    %861 = vmatpush.xpose.msra.mxu0 0.0
    %862 = vmatpush.xpose.msra.mxu0 0.0
    %863 = vmatpush.xpose.msra.mxu0 0.0
    %864 = vmatpush.xpose.msra.mxu0 0.0
    %865 = vmatpush.xpose.msra.mxu0 0.0
    %866 = vmatpush.xpose.msra.mxu0 0.0
    %867 = vmatpush.xpose.msra.mxu0 0.0
    %868 = vmatpush.xpose.msra.mxu0 0.0
    %869 = vmatpush.xpose.msra.mxu0 0.0
    %870 = vmatpush.xpose.msra.mxu0 0.0
    %871 = vmatpush.xpose.msra.mxu0 0.0
    %872 = vmatpush.xpose.msra.mxu0 0.0
    %873 = vmatpush.xpose.msra.mxu0 %v856
    %874 = vmatmul.f32.gmra.mxu0 %v854
    %v875 = vpop.f32.mrf.mxu0
    %v876 = vadd.f32 0.0, %v875
    %877 = vdwg.mxu0
    %v878 = vsel %vm137, %v876, -inf
    %879 = vmax.xlane.f32.xlu0 %v878
    %v880 = vpop.xlane.xlu0 %879
    %v881 = vsub.f32 %v876, %v880
    %v882 = vmul.f32 %v881, 1.442695
    %v883 = vpow.pop %v882
    %v884 = vsel %vm137, %v883, 0.0
    %885 = vadd.xlane.f32.xlu0 %v884
    %v886 = vpop.xlane.xlu0 %885
    %v887 = vrcp.pop %v886
    %v888 = vmul.f32 %v883, %v887
    %889 = vrot.lane.b32.xlu0 %v99, 64
    %v890 = vpop.permute.xlu0 %889
    %v893 = vsel %vm137, %v888, 0
    %895 = vmatpush.msra.mxu0 0.0
    %896 = vmatpush.msra.mxu0 0.0
    %897 = vmatpush.msra.mxu0 0.0
    %898 = vmatpush.msra.mxu0 0.0
    %899 = vmatpush.msra.mxu0 0.0
    %900 = vmatpush.msra.mxu0 0.0
    %901 = vmatpush.msra.mxu0 0.0
    %902 = vmatpush.msra.mxu0 0.0
    %903 = vmatpush.msra.mxu0 0.0
    %904 = vmatpush.msra.mxu0 0.0
    %905 = vmatpush.msra.mxu0 0.0
    %906 = vmatpush.msra.mxu0 0.0
    %907 = vmatpush.msra.mxu0 0.0
    %908 = vmatpush.msra.mxu0 0.0
    %909 = vmatpush.msra.mxu0 0.0
    %910 = vmatpush.msra.mxu0 %v890
    %911 = vmatmul.f32.gmra.mxu0 %v893
    %v912 = vpop.f32.mrf.mxu0
    %v913 = vadd.f32 0.0, %v912
    %914 = vdwg.mxu0
    %915 = vrot.lane.b32.xlu0 %v102, 124
    %v916 = vpop.permute.xlu0 %915
    %917 = vrot.lane.b32.xlu0 %v99, 92
    %v918 = vpop.permute.xlu0 %917
    %v919 = vsel %vm111, %v916, 0
    %v921 = vsel %vm111, %v918, 0
    %923 = vmatpush.xpose.msra.mxu0 0.0
    %924 = vmatpush.xpose.msra.mxu0 0.0
    %925 = vmatpush.xpose.msra.mxu0 0.0
    %926 = vmatpush.xpose.msra.mxu0 0.0
    %927 = vmatpush.xpose.msra.mxu0 0.0
    %928 = vmatpush.xpose.msra.mxu0 0.0
    %929 = vmatpush.xpose.msra.mxu0 0.0
    %930 = vmatpush.xpose.msra.mxu0 0.0
    %931 = vmatpush.xpose.msra.mxu0 0.0
    %932 = vmatpush.xpose.msra.mxu0 0.0
    %933 = vmatpush.xpose.msra.mxu0 0.0
    %934 = vmatpush.xpose.msra.mxu0 0.0
    %935 = vmatpush.xpose.msra.mxu0 0.0
    %936 = vmatpush.xpose.msra.mxu0 0.0
    %937 = vmatpush.xpose.msra.mxu0 0.0
    %938 = vmatpush.xpose.msra.mxu0 %v921
    %939 = vmatmul.f32.gmra.mxu0 %v919
    %v940 = vpop.f32.mrf.mxu0
    %v941 = vadd.f32 0.0, %v940
    %942 = vdwg.mxu0
    %v943 = vsel %vm137, %v941, -inf
    %944 = vmax.xlane.f32.xlu0 %v943
    %v945 = vpop.xlane.xlu0 %944
    %v946 = vsub.f32 %v941, %v945
    %v947 = vmul.f32 %v946, 1.442695
    %v948 = vpow.pop %v947
    %v949 = vsel %vm137, %v948, 0.0
    %950 = vadd.xlane.f32.xlu0 %v949
    %v951 = vpop.xlane.xlu0 %950
    %v952 = vrcp.pop %v951
    %v953 = vmul.f32 %v948, %v952
    %954 = vrot.lane.b32.xlu0 %v99, 60
    %v955 = vpop.permute.xlu0 %954
    %v958 = vsel %vm137, %v953, 0
    %960 = vmatpush.msra.mxu0 0.0
    %961 = vmatpush.msra.mxu0 0.0
    %962 = vmatpush.msra.mxu0 0.0
    %963 = vmatpush.msra.mxu0 0.0
    %964 = vmatpush.msra.mxu0 0.0
    %965 = vmatpush.msra.mxu0 0.0
    %966 = vmatpush.msra.mxu0 0.0
    %967 = vmatpush.msra.mxu0 0.0
    %968 = vmatpush.msra.mxu0 0.0
    %969 = vmatpush.msra.mxu0 0.0
    %970 = vmatpush.msra.mxu0 0.0
    %971 = vmatpush.msra.mxu0 0.0
    %972 = vmatpush.msra.mxu0 0.0
    %973 = vmatpush.msra.mxu0 0.0
    %974 = vmatpush.msra.mxu0 0.0
    %975 = vmatpush.msra.mxu0 %v955
    %976 = vmatmul.f32.gmra.mxu0 %v958
    %v977 = vpop.f32.mrf.mxu0
    %v978 = vadd.f32 0.0, %v977
    %979 = vdwg.mxu0
    %v981 = vsel %vm111, %v978, 0
    %983 = vmatpush.msra.mxu0 0.0
    %984 = vmatpush.msra.mxu0 0.0
    %985 = vmatpush.msra.mxu0 0.0
    %986 = vmatpush.msra.mxu0 0.0
    %987 = vmatpush.msra.mxu0 0.0
    %988 = vmatpush.msra.mxu0 0.0
    %989 = vmatpush.msra.mxu0 0.0
    %990 = vmatpush.msra.mxu0 0.0
    %991 = vmatpush.msra.mxu0 0.0
    %992 = vmatpush.msra.mxu0 0.0
    %993 = vmatpush.msra.mxu0 0.0
    %994 = vmatpush.msra.mxu0 0.0
    %995 = vmatpush.msra.mxu0 0.0
    %996 = vmatpush.msra.mxu0 0.0
    %997 = vmatpush.msra.mxu0 0.0
    %998 = vmatpush.msra.mxu0 %v246
    %999 = vmatmul.f32.gmra.mxu0 %v981
    %v1000 = vpop.f32.mrf.mxu0
    %v1001 = vadd.f32 0.0, %v1000
    %1002 = vdwg.mxu0
    %v1004 = vsel %vm111, %v913, 0
    %1006 = vmatpush.msra.mxu0 0.0
    %1007 = vmatpush.msra.mxu0 0.0
    %1008 = vmatpush.msra.mxu0 0.0
    %1009 = vmatpush.msra.mxu0 0.0
    %1010 = vmatpush.msra.mxu0 0.0
    %1011 = vmatpush.msra.mxu0 0.0
    %1012 = vmatpush.msra.mxu0 0.0
    %1013 = vmatpush.msra.mxu0 0.0
    %1014 = vmatpush.msra.mxu0 0.0
    %1015 = vmatpush.msra.mxu0 0.0
    %1016 = vmatpush.msra.mxu0 0.0
    %1017 = vmatpush.msra.mxu0 0.0
    %1018 = vmatpush.msra.mxu0 0.0
    %1019 = vmatpush.msra.mxu0 0.0
    %1020 = vmatpush.msra.mxu0 0.0
    %1021 = vmatpush.msra.mxu0 %v271
    %1022 = vmatmul.f32.gmra.mxu0 %v1004
    %v1023 = vpop.f32.mrf.mxu0
    %v1024 = vadd.f32 %v1001, %v1023
    %1025 = vdwg.mxu0
    %1026 = vrot.lane.b32.xlu0 %v102, 120
    %v1027 = vpop.permute.xlu0 %1026
    %1028 = vrot.lane.b32.xlu0 %v99, 88
    %v1029 = vpop.permute.xlu0 %1028
    %v1030 = vsel %vm111, %v1027, 0
    %v1032 = vsel %vm111, %v1029, 0
    %1034 = vmatpush.xpose.msra.mxu0 0.0
    %1035 = vmatpush.xpose.msra.mxu0 0.0
    %1036 = vmatpush.xpose.msra.mxu0 0.0
    %1037 = vmatpush.xpose.msra.mxu0 0.0
    %1038 = vmatpush.xpose.msra.mxu0 0.0
    %1039 = vmatpush.xpose.msra.mxu0 0.0
    %1040 = vmatpush.xpose.msra.mxu0 0.0
    %1041 = vmatpush.xpose.msra.mxu0 0.0
    %1042 = vmatpush.xpose.msra.mxu0 0.0
    %1043 = vmatpush.xpose.msra.mxu0 0.0
    %1044 = vmatpush.xpose.msra.mxu0 0.0
    %1045 = vmatpush.xpose.msra.mxu0 0.0
    %1046 = vmatpush.xpose.msra.mxu0 0.0
    %1047 = vmatpush.xpose.msra.mxu0 0.0
    %1048 = vmatpush.xpose.msra.mxu0 0.0
    %1049 = vmatpush.xpose.msra.mxu0 %v1032
    %1050 = vmatmul.f32.gmra.mxu0 %v1030
    %v1051 = vpop.f32.mrf.mxu0
    %v1052 = vadd.f32 0.0, %v1051
    %1053 = vdwg.mxu0
    %v1054 = vsel %vm137, %v1052, -inf
    %1055 = vmax.xlane.f32.xlu0 %v1054
    %v1056 = vpop.xlane.xlu0 %1055
    %v1057 = vsub.f32 %v1052, %v1056
    %v1058 = vmul.f32 %v1057, 1.442695
    %v1059 = vpow.pop %v1058
    %v1060 = vsel %vm137, %v1059, 0.0
    %1061 = vadd.xlane.f32.xlu0 %v1060
    %v1062 = vpop.xlane.xlu0 %1061
    %v1063 = vrcp.pop %v1062
    %v1064 = vmul.f32 %v1059, %v1063
    %1065 = vrot.lane.b32.xlu0 %v99, 56
    %v1066 = vpop.permute.xlu0 %1065
    %v1069 = vsel %vm137, %v1064, 0
    %1071 = vmatpush.msra.mxu0 0.0
    %1072 = vmatpush.msra.mxu0 0.0
    %1073 = vmatpush.msra.mxu0 0.0
    %1074 = vmatpush.msra.mxu0 0.0
    %1075 = vmatpush.msra.mxu0 0.0
    %1076 = vmatpush.msra.mxu0 0.0
    %1077 = vmatpush.msra.mxu0 0.0
    %1078 = vmatpush.msra.mxu0 0.0
    %1079 = vmatpush.msra.mxu0 0.0
    %1080 = vmatpush.msra.mxu0 0.0
    %1081 = vmatpush.msra.mxu0 0.0
    %1082 = vmatpush.msra.mxu0 0.0
    %1083 = vmatpush.msra.mxu0 0.0
    %1084 = vmatpush.msra.mxu0 0.0
    %1085 = vmatpush.msra.mxu0 0.0
    %1086 = vmatpush.msra.mxu0 %v1066
    %1087 = vmatmul.f32.gmra.mxu0 %v1069
    %v1088 = vpop.f32.mrf.mxu0
    %v1089 = vadd.f32 0.0, %v1088
    %1090 = vdwg.mxu0
    %v1092 = vsel %vm111, %v1089, 0
    %1094 = vmatpush.msra.mxu0 0.0
    %1095 = vmatpush.msra.mxu0 0.0
    %1096 = vmatpush.msra.mxu0 0.0
    %1097 = vmatpush.msra.mxu0 0.0
    %1098 = vmatpush.msra.mxu0 0.0
    %1099 = vmatpush.msra.mxu0 0.0
    %1100 = vmatpush.msra.mxu0 0.0
    %1101 = vmatpush.msra.mxu0 0.0
    %1102 = vmatpush.msra.mxu0 0.0
    %1103 = vmatpush.msra.mxu0 0.0
    %1104 = vmatpush.msra.mxu0 0.0
    %1105 = vmatpush.msra.mxu0 0.0
    %1106 = vmatpush.msra.mxu0 0.0
    %1107 = vmatpush.msra.mxu0 0.0
    %1108 = vmatpush.msra.mxu0 0.0
    %1109 = vmatpush.msra.mxu0 %v362
    %1110 = vmatmul.f32.gmra.mxu0 %v1092
    %v1111 = vpop.f32.mrf.mxu0
    %v1112 = vadd.f32 0.0, %v1111
    %1113 = vdwg.mxu0
    %v1114 = vadd.f32 %v1024, %v1112
    %1115 = vrot.lane.b32.xlu0 %v102, 116
    %v1116 = vpop.permute.xlu0 %1115
    %1117 = vrot.lane.b32.xlu0 %v99, 84
    %v1118 = vpop.permute.xlu0 %1117
    %v1119 = vsel %vm111, %v1116, 0
    %v1121 = vsel %vm111, %v1118, 0
    %1123 = vmatpush.xpose.msra.mxu0 0.0
    %1124 = vmatpush.xpose.msra.mxu0 0.0
    %1125 = vmatpush.xpose.msra.mxu0 0.0
    %1126 = vmatpush.xpose.msra.mxu0 0.0
    %1127 = vmatpush.xpose.msra.mxu0 0.0
    %1128 = vmatpush.xpose.msra.mxu0 0.0
    %1129 = vmatpush.xpose.msra.mxu0 0.0
    %1130 = vmatpush.xpose.msra.mxu0 0.0
    %1131 = vmatpush.xpose.msra.mxu0 0.0
    %1132 = vmatpush.xpose.msra.mxu0 0.0
    %1133 = vmatpush.xpose.msra.mxu0 0.0
    %1134 = vmatpush.xpose.msra.mxu0 0.0
    %1135 = vmatpush.xpose.msra.mxu0 0.0
    %1136 = vmatpush.xpose.msra.mxu0 0.0
    %1137 = vmatpush.xpose.msra.mxu0 0.0
    %1138 = vmatpush.xpose.msra.mxu0 %v1121
    %1139 = vmatmul.f32.gmra.mxu0 %v1119
    %v1140 = vpop.f32.mrf.mxu0
    %v1141 = vadd.f32 0.0, %v1140
    %1142 = vdwg.mxu0
    %v1143 = vsel %vm137, %v1141, -inf
    %1144 = vmax.xlane.f32.xlu0 %v1143
    %v1145 = vpop.xlane.xlu0 %1144
    %v1146 = vsub.f32 %v1141, %v1145
    %v1147 = vmul.f32 %v1146, 1.442695
    %v1148 = vpow.pop %v1147
    %v1149 = vsel %vm137, %v1148, 0.0
    %1150 = vadd.xlane.f32.xlu0 %v1149
    %v1151 = vpop.xlane.xlu0 %1150
    %v1152 = vrcp.pop %v1151
    %v1153 = vmul.f32 %v1148, %v1152
    %1154 = vrot.lane.b32.xlu0 %v99, 52
    %v1155 = vpop.permute.xlu0 %1154
    %v1158 = vsel %vm137, %v1153, 0
    %1160 = vmatpush.msra.mxu0 0.0
    %1161 = vmatpush.msra.mxu0 0.0
    %1162 = vmatpush.msra.mxu0 0.0
    %1163 = vmatpush.msra.mxu0 0.0
    %1164 = vmatpush.msra.mxu0 0.0
    %1165 = vmatpush.msra.mxu0 0.0
    %1166 = vmatpush.msra.mxu0 0.0
    %1167 = vmatpush.msra.mxu0 0.0
    %1168 = vmatpush.msra.mxu0 0.0
    %1169 = vmatpush.msra.mxu0 0.0
    %1170 = vmatpush.msra.mxu0 0.0
    %1171 = vmatpush.msra.mxu0 0.0
    %1172 = vmatpush.msra.mxu0 0.0
    %1173 = vmatpush.msra.mxu0 0.0
    %1174 = vmatpush.msra.mxu0 0.0
    %1175 = vmatpush.msra.mxu0 %v1155
    %1176 = vmatmul.f32.gmra.mxu0 %v1158
    %v1177 = vpop.f32.mrf.mxu0
    %v1178 = vadd.f32 0.0, %v1177
    %1179 = vdwg.mxu0
    %v1181 = vsel %vm111, %v1178, 0
    %1183 = vmatpush.msra.mxu0 0.0
    %1184 = vmatpush.msra.mxu0 0.0
    %1185 = vmatpush.msra.mxu0 0.0
    %1186 = vmatpush.msra.mxu0 0.0
    %1187 = vmatpush.msra.mxu0 0.0
    %1188 = vmatpush.msra.mxu0 0.0
    %1189 = vmatpush.msra.mxu0 0.0
    %1190 = vmatpush.msra.mxu0 0.0
    %1191 = vmatpush.msra.mxu0 0.0
    %1192 = vmatpush.msra.mxu0 0.0
    %1193 = vmatpush.msra.mxu0 0.0
    %1194 = vmatpush.msra.mxu0 0.0
    %1195 = vmatpush.msra.mxu0 0.0
    %1196 = vmatpush.msra.mxu0 0.0
    %1197 = vmatpush.msra.mxu0 0.0
    %1198 = vmatpush.msra.mxu0 %v454
    %1199 = vmatmul.f32.gmra.mxu0 %v1181
    %v1200 = vpop.f32.mrf.mxu0
    %v1201 = vadd.f32 0.0, %v1200
    %1202 = vdwg.mxu0
    %v1203 = vadd.f32 %v1114, %v1201
    %1204 = vrot.lane.b32.xlu0 %v102, 112
    %v1205 = vpop.permute.xlu0 %1204
    %1206 = vrot.lane.b32.xlu0 %v99, 80
    %v1207 = vpop.permute.xlu0 %1206
    %v1208 = vsel %vm111, %v1205, 0
    %v1210 = vsel %vm111, %v1207, 0
    %1212 = vmatpush.xpose.msra.mxu0 0.0
    %1213 = vmatpush.xpose.msra.mxu0 0.0
    %1214 = vmatpush.xpose.msra.mxu0 0.0
    %1215 = vmatpush.xpose.msra.mxu0 0.0
    %1216 = vmatpush.xpose.msra.mxu0 0.0
    %1217 = vmatpush.xpose.msra.mxu0 0.0
    %1218 = vmatpush.xpose.msra.mxu0 0.0
    %1219 = vmatpush.xpose.msra.mxu0 0.0
    %1220 = vmatpush.xpose.msra.mxu0 0.0
    %1221 = vmatpush.xpose.msra.mxu0 0.0
    %1222 = vmatpush.xpose.msra.mxu0 0.0
    %1223 = vmatpush.xpose.msra.mxu0 0.0
    %1224 = vmatpush.xpose.msra.mxu0 0.0
    %1225 = vmatpush.xpose.msra.mxu0 0.0
    %1226 = vmatpush.xpose.msra.mxu0 0.0
    %1227 = vmatpush.xpose.msra.mxu0 %v1210
    %1228 = vmatmul.f32.gmra.mxu0 %v1208
    %v1229 = vpop.f32.mrf.mxu0
    %v1230 = vadd.f32 0.0, %v1229
    %1231 = vdwg.mxu0
    %v1232 = vsel %vm137, %v1230, -inf
    %1233 = vmax.xlane.f32.xlu0 %v1232
    %v1234 = vpop.xlane.xlu0 %1233
    %v1235 = vsub.f32 %v1230, %v1234
    %v1236 = vmul.f32 %v1235, 1.442695
    %v1237 = vpow.pop %v1236
    %v1238 = vsel %vm137, %v1237, 0.0
    %1239 = vadd.xlane.f32.xlu0 %v1238
    %v1240 = vpop.xlane.xlu0 %1239
    %v1241 = vrcp.pop %v1240
    %v1242 = vmul.f32 %v1237, %v1241
    %1243 = vrot.lane.b32.xlu0 %v99, 48
    %v1244 = vpop.permute.xlu0 %1243
    %v1247 = vsel %vm137, %v1242, 0
    %1249 = vmatpush.msra.mxu0 0.0
    %1250 = vmatpush.msra.mxu0 0.0
    %1251 = vmatpush.msra.mxu0 0.0
    %1252 = vmatpush.msra.mxu0 0.0
    %1253 = vmatpush.msra.mxu0 0.0
    %1254 = vmatpush.msra.mxu0 0.0
    %1255 = vmatpush.msra.mxu0 0.0
    %1256 = vmatpush.msra.mxu0 0.0
    %1257 = vmatpush.msra.mxu0 0.0
    %1258 = vmatpush.msra.mxu0 0.0
    %1259 = vmatpush.msra.mxu0 0.0
    %1260 = vmatpush.msra.mxu0 0.0
    %1261 = vmatpush.msra.mxu0 0.0
    %1262 = vmatpush.msra.mxu0 0.0
    %1263 = vmatpush.msra.mxu0 0.0
    %1264 = vmatpush.msra.mxu0 %v1244
    %1265 = vmatmul.f32.gmra.mxu0 %v1247
    %v1266 = vpop.f32.mrf.mxu0
    %v1267 = vadd.f32 0.0, %v1266
    %1268 = vdwg.mxu0
    %v1270 = vsel %vm111, %v1267, 0
    %1272 = vmatpush.msra.mxu0 0.0
    %1273 = vmatpush.msra.mxu0 0.0
    %1274 = vmatpush.msra.mxu0 0.0
    %1275 = vmatpush.msra.mxu0 0.0
    %1276 = vmatpush.msra.mxu0 0.0
    %1277 = vmatpush.msra.mxu0 0.0
    %1278 = vmatpush.msra.mxu0 0.0
    %1279 = vmatpush.msra.mxu0 0.0
    %1280 = vmatpush.msra.mxu0 0.0
    %1281 = vmatpush.msra.mxu0 0.0
    %1282 = vmatpush.msra.mxu0 0.0
    %1283 = vmatpush.msra.mxu0 0.0
    %1284 = vmatpush.msra.mxu0 0.0
    %1285 = vmatpush.msra.mxu0 0.0
    %1286 = vmatpush.msra.mxu0 0.0
    %1287 = vmatpush.msra.mxu0 %v546
    %1288 = vmatmul.f32.gmra.mxu0 %v1270
    %v1289 = vpop.f32.mrf.mxu0
    %v1290 = vadd.f32 0.0, %v1289
    %1291 = vdwg.mxu0
    %v1292 = vadd.f32 %v1203, %v1290
    %1293 = vrot.lane.b32.xlu0 %v102, 108
    %v1294 = vpop.permute.xlu0 %1293
    %1295 = vrot.lane.b32.xlu0 %v99, 76
    %v1296 = vpop.permute.xlu0 %1295
    %v1297 = vsel %vm111, %v1294, 0
    %v1299 = vsel %vm111, %v1296, 0
    %1301 = vmatpush.xpose.msra.mxu0 0.0
    %1302 = vmatpush.xpose.msra.mxu0 0.0
    %1303 = vmatpush.xpose.msra.mxu0 0.0
    %1304 = vmatpush.xpose.msra.mxu0 0.0
    %1305 = vmatpush.xpose.msra.mxu0 0.0
    %1306 = vmatpush.xpose.msra.mxu0 0.0
    %1307 = vmatpush.xpose.msra.mxu0 0.0
    %1308 = vmatpush.xpose.msra.mxu0 0.0
    %1309 = vmatpush.xpose.msra.mxu0 0.0
    %1310 = vmatpush.xpose.msra.mxu0 0.0
    %1311 = vmatpush.xpose.msra.mxu0 0.0
    %1312 = vmatpush.xpose.msra.mxu0 0.0
    %1313 = vmatpush.xpose.msra.mxu0 0.0
    %1314 = vmatpush.xpose.msra.mxu0 0.0
    %1315 = vmatpush.xpose.msra.mxu0 0.0
    %1316 = vmatpush.xpose.msra.mxu0 %v1299
    %1317 = vmatmul.f32.gmra.mxu0 %v1297
    %v1318 = vpop.f32.mrf.mxu0
    %v1319 = vadd.f32 0.0, %v1318
    %1320 = vdwg.mxu0
    %v1321 = vsel %vm137, %v1319, -inf
    %1322 = vmax.xlane.f32.xlu0 %v1321
    %v1323 = vpop.xlane.xlu0 %1322
    %v1324 = vsub.f32 %v1319, %v1323
    %v1325 = vmul.f32 %v1324, 1.442695
    %v1326 = vpow.pop %v1325
    %v1327 = vsel %vm137, %v1326, 0.0
    %1328 = vadd.xlane.f32.xlu0 %v1327
    %v1329 = vpop.xlane.xlu0 %1328
    %v1330 = vrcp.pop %v1329
    %v1331 = vmul.f32 %v1326, %v1330
    %1332 = vrot.lane.b32.xlu0 %v99, 44
    %v1333 = vpop.permute.xlu0 %1332
    %v1336 = vsel %vm137, %v1331, 0
    %1338 = vmatpush.msra.mxu0 0.0
    %1339 = vmatpush.msra.mxu0 0.0
    %1340 = vmatpush.msra.mxu0 0.0
    %1341 = vmatpush.msra.mxu0 0.0
    %1342 = vmatpush.msra.mxu0 0.0
    %1343 = vmatpush.msra.mxu0 0.0
    %1344 = vmatpush.msra.mxu0 0.0
    %1345 = vmatpush.msra.mxu0 0.0
    %1346 = vmatpush.msra.mxu0 0.0
    %1347 = vmatpush.msra.mxu0 0.0
    %1348 = vmatpush.msra.mxu0 0.0
    %1349 = vmatpush.msra.mxu0 0.0
    %1350 = vmatpush.msra.mxu0 0.0
    %1351 = vmatpush.msra.mxu0 0.0
    %1352 = vmatpush.msra.mxu0 0.0
    %1353 = vmatpush.msra.mxu0 %v1333
    %1354 = vmatmul.f32.gmra.mxu0 %v1336
    %v1355 = vpop.f32.mrf.mxu0
    %v1356 = vadd.f32 0.0, %v1355
    %1357 = vdwg.mxu0
    %v1359 = vsel %vm111, %v1356, 0
    %1361 = vmatpush.msra.mxu0 0.0
    %1362 = vmatpush.msra.mxu0 0.0
    %1363 = vmatpush.msra.mxu0 0.0
    %1364 = vmatpush.msra.mxu0 0.0
    %1365 = vmatpush.msra.mxu0 0.0
    %1366 = vmatpush.msra.mxu0 0.0
    %1367 = vmatpush.msra.mxu0 0.0
    %1368 = vmatpush.msra.mxu0 0.0
    %1369 = vmatpush.msra.mxu0 0.0
    %1370 = vmatpush.msra.mxu0 0.0
    %1371 = vmatpush.msra.mxu0 0.0
    %1372 = vmatpush.msra.mxu0 0.0
    %1373 = vmatpush.msra.mxu0 0.0
    %1374 = vmatpush.msra.mxu0 0.0
    %1375 = vmatpush.msra.mxu0 0.0
    %1376 = vmatpush.msra.mxu0 %v638
    %1377 = vmatmul.f32.gmra.mxu0 %v1359
    %v1378 = vpop.f32.mrf.mxu0
    %v1379 = vadd.f32 0.0, %v1378
    %1380 = vdwg.mxu0
    %v1381 = vadd.f32 %v1292, %v1379
    %1382 = vrot.lane.b32.xlu0 %v102, 104
    %v1383 = vpop.permute.xlu0 %1382
    %1384 = vrot.lane.b32.xlu0 %v99, 72
    %v1385 = vpop.permute.xlu0 %1384
    %v1386 = vsel %vm111, %v1383, 0
    %v1388 = vsel %vm111, %v1385, 0
    %1390 = vmatpush.xpose.msra.mxu0 0.0
    %1391 = vmatpush.xpose.msra.mxu0 0.0
    %1392 = vmatpush.xpose.msra.mxu0 0.0
    %1393 = vmatpush.xpose.msra.mxu0 0.0
    %1394 = vmatpush.xpose.msra.mxu0 0.0
    %1395 = vmatpush.xpose.msra.mxu0 0.0
    %1396 = vmatpush.xpose.msra.mxu0 0.0
    %1397 = vmatpush.xpose.msra.mxu0 0.0
    %1398 = vmatpush.xpose.msra.mxu0 0.0
    %1399 = vmatpush.xpose.msra.mxu0 0.0
    %1400 = vmatpush.xpose.msra.mxu0 0.0
    %1401 = vmatpush.xpose.msra.mxu0 0.0
    %1402 = vmatpush.xpose.msra.mxu0 0.0
    %1403 = vmatpush.xpose.msra.mxu0 0.0
    %1404 = vmatpush.xpose.msra.mxu0 0.0
    %1405 = vmatpush.xpose.msra.mxu0 %v1388
    %1406 = vmatmul.f32.gmra.mxu0 %v1386
    %v1407 = vpop.f32.mrf.mxu0
    %v1408 = vadd.f32 0.0, %v1407
    %1409 = vdwg.mxu0
    %v1410 = vsel %vm137, %v1408, -inf
    %1411 = vmax.xlane.f32.xlu0 %v1410
    %v1412 = vpop.xlane.xlu0 %1411
    %v1413 = vsub.f32 %v1408, %v1412
    %v1414 = vmul.f32 %v1413, 1.442695
    %v1415 = vpow.pop %v1414
    %v1416 = vsel %vm137, %v1415, 0.0
    %1417 = vadd.xlane.f32.xlu0 %v1416
    %v1418 = vpop.xlane.xlu0 %1417
    %v1419 = vrcp.pop %v1418
    %v1420 = vmul.f32 %v1415, %v1419
    %1421 = vrot.lane.b32.xlu0 %v99, 40
    %v1422 = vpop.permute.xlu0 %1421
    %v1425 = vsel %vm137, %v1420, 0
    %1427 = vmatpush.msra.mxu0 0.0
    %1428 = vmatpush.msra.mxu0 0.0
    %1429 = vmatpush.msra.mxu0 0.0
    %1430 = vmatpush.msra.mxu0 0.0
    %1431 = vmatpush.msra.mxu0 0.0
    %1432 = vmatpush.msra.mxu0 0.0
    %1433 = vmatpush.msra.mxu0 0.0
    %1434 = vmatpush.msra.mxu0 0.0
    %1435 = vmatpush.msra.mxu0 0.0
    %1436 = vmatpush.msra.mxu0 0.0
    %1437 = vmatpush.msra.mxu0 0.0
    %1438 = vmatpush.msra.mxu0 0.0
    %1439 = vmatpush.msra.mxu0 0.0
    %1440 = vmatpush.msra.mxu0 0.0
    %1441 = vmatpush.msra.mxu0 0.0
    %1442 = vmatpush.msra.mxu0 %v1422
    %1443 = vmatmul.f32.gmra.mxu0 %v1425
    %v1444 = vpop.f32.mrf.mxu0
    %v1445 = vadd.f32 0.0, %v1444
    %1446 = vdwg.mxu0
    %v1448 = vsel %vm111, %v1445, 0
    %1450 = vmatpush.msra.mxu0 0.0
    %1451 = vmatpush.msra.mxu0 0.0
    %1452 = vmatpush.msra.mxu0 0.0
    %1453 = vmatpush.msra.mxu0 0.0
    %1454 = vmatpush.msra.mxu0 0.0
    %1455 = vmatpush.msra.mxu0 0.0
    %1456 = vmatpush.msra.mxu0 0.0
    %1457 = vmatpush.msra.mxu0 0.0
    %1458 = vmatpush.msra.mxu0 0.0
    %1459 = vmatpush.msra.mxu0 0.0
    %1460 = vmatpush.msra.mxu0 0.0
    %1461 = vmatpush.msra.mxu0 0.0
    %1462 = vmatpush.msra.mxu0 0.0
    %1463 = vmatpush.msra.mxu0 0.0
    %1464 = vmatpush.msra.mxu0 0.0
    %1465 = vmatpush.msra.mxu0 %v730
    %1466 = vmatmul.f32.gmra.mxu0 %v1448
    %v1467 = vpop.f32.mrf.mxu0
    %v1468 = vadd.f32 0.0, %v1467
    %1469 = vdwg.mxu0
    %v1470 = vadd.f32 %v1381, %v1468
    %1471 = vrot.lane.b32.xlu0 %v102, 100
    %v1472 = vpop.permute.xlu0 %1471
    %1473 = vrot.lane.b32.xlu0 %v99, 68
    %v1474 = vpop.permute.xlu0 %1473
    %v1475 = vsel %vm111, %v1472, 0
    %v1477 = vsel %vm111, %v1474, 0
    %1479 = vmatpush.xpose.msra.mxu0 0.0
    %1480 = vmatpush.xpose.msra.mxu0 0.0
    %1481 = vmatpush.xpose.msra.mxu0 0.0
    %1482 = vmatpush.xpose.msra.mxu0 0.0
    %1483 = vmatpush.xpose.msra.mxu0 0.0
    %1484 = vmatpush.xpose.msra.mxu0 0.0
    %1485 = vmatpush.xpose.msra.mxu0 0.0
    %1486 = vmatpush.xpose.msra.mxu0 0.0
    %1487 = vmatpush.xpose.msra.mxu0 0.0
    %1488 = vmatpush.xpose.msra.mxu0 0.0
    %1489 = vmatpush.xpose.msra.mxu0 0.0
    %1490 = vmatpush.xpose.msra.mxu0 0.0
    %1491 = vmatpush.xpose.msra.mxu0 0.0
    %1492 = vmatpush.xpose.msra.mxu0 0.0
    %1493 = vmatpush.xpose.msra.mxu0 0.0
    %1494 = vmatpush.xpose.msra.mxu0 %v1477
    %1495 = vmatmul.f32.gmra.mxu0 %v1475
    %v1496 = vpop.f32.mrf.mxu0
    %v1497 = vadd.f32 0.0, %v1496
    %1498 = vdwg.mxu0
    %v1499 = vsel %vm137, %v1497, -inf
    %1500 = vmax.xlane.f32.xlu0 %v1499
    %v1501 = vpop.xlane.xlu0 %1500
    %v1502 = vsub.f32 %v1497, %v1501
    %v1503 = vmul.f32 %v1502, 1.442695
    %v1504 = vpow.pop %v1503
    %v1505 = vsel %vm137, %v1504, 0.0
    %1506 = vadd.xlane.f32.xlu0 %v1505
    %v1507 = vpop.xlane.xlu0 %1506
    %v1508 = vrcp.pop %v1507
    %v1509 = vmul.f32 %v1504, %v1508
    %1510 = vrot.lane.b32.xlu0 %v99, 36
    %v1511 = vpop.permute.xlu0 %1510
    %v1514 = vsel %vm137, %v1509, 0
    %1516 = vmatpush.msra.mxu0 0.0
    %1517 = vmatpush.msra.mxu0 0.0
    %1518 = vmatpush.msra.mxu0 0.0
    %1519 = vmatpush.msra.mxu0 0.0
    %1520 = vmatpush.msra.mxu0 0.0
    %1521 = vmatpush.msra.mxu0 0.0
    %1522 = vmatpush.msra.mxu0 0.0
    %1523 = vmatpush.msra.mxu0 0.0
    %1524 = vmatpush.msra.mxu0 0.0
    %1525 = vmatpush.msra.mxu0 0.0
    %1526 = vmatpush.msra.mxu0 0.0
    %1527 = vmatpush.msra.mxu0 0.0
    %1528 = vmatpush.msra.mxu0 0.0
    %1529 = vmatpush.msra.mxu0 0.0
    %1530 = vmatpush.msra.mxu0 0.0
    %1531 = vmatpush.msra.mxu0 %v1511
    %1532 = vmatmul.f32.gmra.mxu0 %v1514
    %v1533 = vpop.f32.mrf.mxu0
    %v1534 = vadd.f32 0.0, %v1533
    %1535 = vdwg.mxu0
    %v1537 = vsel %vm111, %v1534, 0
    %1539 = vmatpush.msra.mxu0 0.0
    %1540 = vmatpush.msra.mxu0 0.0
    %1541 = vmatpush.msra.mxu0 0.0
    %1542 = vmatpush.msra.mxu0 0.0
    %1543 = vmatpush.msra.mxu0 0.0
    %1544 = vmatpush.msra.mxu0 0.0
    %1545 = vmatpush.msra.mxu0 0.0
    %1546 = vmatpush.msra.mxu0 0.0
    %1547 = vmatpush.msra.mxu0 0.0
    %1548 = vmatpush.msra.mxu0 0.0
    %1549 = vmatpush.msra.mxu0 0.0
    %1550 = vmatpush.msra.mxu0 0.0
    %1551 = vmatpush.msra.mxu0 0.0
    %1552 = vmatpush.msra.mxu0 0.0
    %1553 = vmatpush.msra.mxu0 0.0
    %1554 = vmatpush.msra.mxu0 %v822
    %1555 = vmatmul.f32.gmra.mxu0 %v1537
    %v1556 = vpop.f32.mrf.mxu0
    %v1557 = vadd.f32 0.0, %v1556
    %1558 = vdwg.mxu0
    %v1559 = vadd.f32 %v1470, %v1557
    %v1560 = vadd.f32 %v1559, %v846
    %s1561 = scalar_lea.vmem [#allocation8], 8
    %1562 = vst.msk [vmem:[%s1561] sm:$0xff] %vm71, %v1560
    // Predicated region
    $region30: #{tpu_custom_call.1} parent=1 // pred_check
      _
    $region31: #{tpu_custom_call.1} parent=1 // pred_check_branch
      %1564 = sbr.rel (0) target = $region33
    $region32: #{tpu_custom_call.1} parent=1 // pred_region
      %1566 = vsyncadd [#allocation4], 0
      %s1567 = sshll.u32 [#allocation8], 4
      %s1568 = int_to_ptr.vmem [resolvable:$true] %s1567
      %s1569 = sshll.u32 %s4, 4
      %s1570 = int_to_ptr.hbm [resolvable:$true] %s1569
      %1575 = dma.vmem_to_hbm [thread:$0]  %s1568, 256, %s1570, [#allocation4], 128, 128, 8
    $region33: #{tpu_custom_call.1} parent=1 // pred_fallthru
      _
    // Predicated region
    $region34: #{tpu_custom_call.1} parent=1 // pred_check
      _
    $region35: #{tpu_custom_call.1} parent=1 // pred_check_branch
      %1577 = sbr.rel (0) target = $region37
    $region36: #{tpu_custom_call.1} parent=1 // pred_region
      %1579 = dma.done [#allocation4], 256
    $region37: #{tpu_custom_call.1} parent=1 // pred_fallthru
      _
    %1580 = vsyncpa [#allocation3], 1
    %1581 = vsyncpa [#allocation6], 1
    %1582 = vsyncpa [#allocation4], 1

</llo_original>
